<compile_context>
chip_gen: v7x
topology: tpu7x:2x2x1
jax: 0.10.0
libtpu: 0.0.40
codegen_flags: <defaults>
</compile_context>

<pallas_src>
import numpy as np
import jax
import jax.numpy as jnp
from jax.experimental import pallas as pl
from jax.experimental.pallas import tpu as pltpu


def _round_up(x, m):
    return ((x + m - 1) // m) * m


# ------------------- fused multi-layer LSTM recurrence kernel -----------------
def _make_lstm_kernel(num_layers, seq_len, batch_p, hidden):
    L, T, Bp, H = num_layers, seq_len, batch_p, hidden

    def kernel(*refs):
        x_ref = refs[0]                       # (T*Bp, E)   bf16, time-major
        w_refs = refs[1:1 + 3 * L]            # per layer: w_ih, w_hh (bf16), b (f32)
        out_ref = refs[1 + 3 * L]             # (T*Bp, H)   f32 top-layer hidden seq
        p_scr = refs[2 + 3 * L]               # (T*Bp, Gp)  f32 layer-0 input proj

        w_ih = [w_refs[3 * l][...] for l in range(L)]
        w_hh = [w_refs[3 * l + 1][...] for l in range(L)]
        b = [w_refs[3 * l + 2][...] for l in range(L)]

        # Layer-0 input projection for ALL timesteps: one batched MXU matmul.
        p_scr[...] = jnp.dot(x_ref[...], w_ih[0],
                             preferred_element_type=jnp.float32) + b[0]

        def cell(gates, c_prev):
            # Gate order (i, f, o, g): one sigmoid over the full gate vreg,
            # one tanh for g, one tanh for c -> 3 EUP issues per step.
            sg = jax.nn.sigmoid(gates)
            i_g = sg[:, 0:H]
            f_g = sg[:, H:2 * H]
            o_g = sg[:, 2 * H:3 * H]
            g_g = jnp.tanh(gates[:, 3 * H:4 * H])
            c_new = f_g * c_prev + i_g * g_g
            h_new = o_g * jnp.tanh(c_new)
            return h_new, c_new

        h = [jnp.zeros((Bp, H), jnp.float32) for _ in range(L)]
        c = [jnp.zeros((Bp, H), jnp.float32) for _ in range(L)]

        # Wavefront: layer l at step t is independent of layer l-1 at step t+1,
        # so the two serial matmul+EUP chains overlap.  T is tiny & static ->
        # fully unrolled at trace time (static, sublane-aligned offsets).
        for t in range(T):
            r0 = t * Bp                       # static, multiple of 8
            gates0 = p_scr[pl.ds(r0, Bp), :] + jnp.dot(
                h[0].astype(jnp.bfloat16), w_hh[0],
                preferred_element_type=jnp.float32)
            h[0], c[0] = cell(gates0, c[0])
            for l in range(1, L):
                # Input (h[l-1]) and recurrent (h[l]) contributions as two small
                # K=H matmuls; the first is independent of layer l's own state,
                # so it can issue early in the schedule.
                gates = (jnp.dot(h[l - 1].astype(jnp.bfloat16), w_ih[l],
                                 preferred_element_type=jnp.float32)
                         + jnp.dot(h[l].astype(jnp.bfloat16), w_hh[l],
                                   preferred_element_type=jnp.float32)
                         + b[l])
                h[l], c[l] = cell(gates, c[l])
            out_ref[pl.ds(r0, Bp), :] = h[L - 1]

    return kernel


def lstm_fused(x2d, layer_params, *, seq_len, batch_p, hidden, gate_p):
    """x2d: (T*Bp, E) bf16.  layer_params: list of (w_ih bf16, w_hh bf16, b f32),
    gates packed (i,f,o,g) into gate_p lanes.  Returns (T*Bp, hidden) f32."""
    L = len(layer_params)
    flat = []
    for (w_ih, w_hh, b) in layer_params:
        flat += [w_ih, w_hh, b]
    return pl.pallas_call(
        _make_lstm_kernel(L, seq_len, batch_p, hidden),
        out_shape=jax.ShapeDtypeStruct((seq_len * batch_p, hidden), jnp.float32),
        scratch_shapes=[pltpu.VMEM((seq_len * batch_p, gate_p), jnp.float32)],
    )(x2d, *flat)


# -------------------------- vocab projection kernel ---------------------------
def _proj_kernel(h_ref, w_ref, b_ref, o_ref):
    o_ref[...] = (jnp.dot(h_ref[...].astype(jnp.bfloat16), w_ref[...],
                          preferred_element_type=jnp.float32) + b_ref[...])


def vocab_projection(h_seq, lin_w, lin_b, *, vocab_tile=128):
    """h_seq: (R, H) f32; lin_w: (H, Vp) bf16; lin_b: (1, Vp) f32 -> (R, Vp) f32.
    Parallel grid over 128-lane vocab tiles (lane-dense stores; both TCs on v7x)."""
    R, H = h_seq.shape
    Vp = lin_w.shape[1]
    return pl.pallas_call(
        _proj_kernel,
        out_shape=jax.ShapeDtypeStruct((R, Vp), jnp.float32),
        grid=(Vp // vocab_tile,),
        in_specs=[pl.BlockSpec((R, H), lambda j: (0, 0)),
                  pl.BlockSpec((H, vocab_tile), lambda j: (0, j)),
                  pl.BlockSpec((1, vocab_tile), lambda j: (0, j))],
        out_specs=pl.BlockSpec((R, vocab_tile), lambda j: (0, j)),
        compiler_params=pltpu.CompilerParams(dimension_semantics=("parallel",)),
    )(h_seq, lin_w, lin_b)


# --------------------------- parameter re-layout ------------------------------
def _pack_gates(w, H, Gp):
    """Re-pack (rows, 4H) PyTorch gate order (i,f,g,o) -> (rows, Gp) in (i,f,o,g);
    trailing lanes zero-padded (only hit when 4H is not a multiple of 128)."""
    rows = w.shape[0]
    out = jnp.zeros((rows, Gp), jnp.float32)
    out = out.at[:, 0:H].set(w[:, 0:H])                  # i
    out = out.at[:, H:2 * H].set(w[:, H:2 * H])          # f
    out = out.at[:, 2 * H:3 * H].set(w[:, 3 * H:4 * H])  # o
    out = out.at[:, 3 * H:4 * H].set(w[:, 2 * H:3 * H])  # g
    return out


# --------------------------- DecoderRNN forward -------------------------------
def decoder_rnn_forward(params, features, captions, lengths):
    """Mirror of DecoderRNN.forward.

    features: (B, E) f32; captions: (B, Tcap) int32; lengths: python list (descending).
    Returns packed outputs (sum(lengths), vocab_size)."""
    embed_w = params["embed"]                    # (vocab, E)
    H = params["lstm"][0][1].shape[0]            # w_hh: (H, 4H)
    V = params["linear_w"].shape[1]

    # Embedding lookup (gather) + feature concat — XLA glue, not the hot path.
    emb = embed_w[captions]                                        # (B, Tcap, E)
    emb = jnp.concatenate([features[:, None, :], emb], axis=1)     # (B, T, E)
    B, T, E = emb.shape

    Bp = _round_up(B, 8)          # f32 sublane tile
    Gp = _round_up(4 * H, 128)    # native interleaved gate width, lane-padded
    Vp = _round_up(V, 128)        # lane-dense logits

    # Time-major, batch padded to Bp, flattened to a 2-D slab; bf16 MXU operand.
    x = jnp.zeros((T, Bp, E), jnp.float32).at[:, :B, :].set(
        jnp.transpose(emb, (1, 0, 2)))
    x2d = x.reshape(T * Bp, E).astype(jnp.bfloat16)

    # Gate repack (i,f,o,g) + bf16 weights / f32 biases.  Zero padding keeps the
    # math identical to the unpadded PyTorch semantics.
    layer_params = []
    for (w_ih, w_hh, b) in params["lstm"]:
        layer_params.append((
            _pack_gates(w_ih, H, Gp).astype(jnp.bfloat16),
            _pack_gates(w_hh, H, Gp).astype(jnp.bfloat16),
            _pack_gates(b, H, Gp),
        ))
    lin_w = jnp.zeros((H, Vp), jnp.float32).at[:, :V].set(
        params["linear_w"]).astype(jnp.bfloat16)
    lin_b = jnp.zeros((1, Vp), jnp.float32).at[:, :V].set(params["linear_b"])

    # Kernel 1: fused multi-layer LSTM recurrence (all layers, all timesteps).
    h_seq = lstm_fused(x2d, layer_params, seq_len=T, batch_p=Bp, hidden=H,
                       gate_p=Gp)                                  # (T*Bp, H)

    # Kernel 2: vocab projection, parallel grid over 128-lane vocab tiles.
    logits = vocab_projection(h_seq, lin_w, lin_b)                 # (T*Bp, Vp)

    # pack_padded_sequence row order (time-major, lengths descending); padded
    # timesteps / padded batch rows are simply never selected.
    idx = []
    for t in range(T):
        for bb in range(B):
            if lengths[bb] > t:
                idx.append(t * Bp + bb)
    idx = jnp.asarray(idx, jnp.int32)
    return logits[idx, :V]                                         # (sum(lengths), vocab)


# ----------------------------- pure-JAX reference -----------------------------
def _lstm_ref(x_tbe, layer_params):
    T, B, _ = x_tbe.shape
    L = len(layer_params)
    H = layer_params[0][1].shape[0]
    h = [jnp.zeros((B, H), jnp.float32) for _ in range(L)]
    c = [jnp.zeros((B, H), jnp.float32) for _ in range(L)]
    outs = []
    for t in range(T):
        inp = x_tbe[t]
        for l in range(L):
            w_ih, w_hh, b = layer_params[l]
            gates = inp @ w_ih + h[l] @ w_hh + b
            i = jax.nn.sigmoid(gates[:, :H])
            f = jax.nn.sigmoid(gates[:, H:2 * H])
            g = jnp.tanh(gates[:, 2 * H:3 * H])
            o = jax.nn.sigmoid(gates[:, 3 * H:])
            c[l] = f * c[l] + i * g
            h[l] = o * jnp.tanh(c[l])
            inp = h[l]
        outs.append(inp)
    return jnp.stack(outs, 0)


# ----------------------------------- main --------------------------------------
if __name__ == "__main__":
    # Hyper-parameters (small, consistent with the module).
    embed_size = 32
    hidden_size = 32
    vocab_size = 48
    num_layers = 2
    batch = 2
    cap_len = 8                 # sequence length T = cap_len + 1
    lengths = [9, 7]            # sorted descending (pack_padded_sequence default)

    key = jax.random.PRNGKey(0)
    keys = jax.random.split(key, 4 + 3 * num_layers)

    # Deterministic parameters (shapes follow nn.Embedding / nn.LSTM / nn.Linear).
    embed_w = jax.random.normal(keys[0], (vocab_size, embed_size), jnp.float32) * 0.1
    lstm_params = []
    for l in range(num_layers):
        e_in = embed_size if l == 0 else hidden_size
        w_ih = jax.random.normal(keys[1 + 3 * l], (e_in, 4 * hidden_size), jnp.float32) * 0.1
        w_hh = jax.random.normal(keys[2 + 3 * l], (hidden_size, 4 * hidden_size), jnp.float32) * 0.1
        b = jax.random.normal(keys[3 + 3 * l], (1, 4 * hidden_size), jnp.float32) * 0.1  # b_ih + b_hh
        lstm_params.append((w_ih, w_hh, b))
    linear_w = jax.random.normal(keys[-2], (hidden_size, vocab_size), jnp.float32) * 0.1
    linear_b = jax.random.normal(keys[-1], (1, vocab_size), jnp.float32) * 0.1

    params = {"embed": embed_w, "lstm": lstm_params,
              "linear_w": linear_w, "linear_b": linear_b}

    # Inputs.
    k_f, k_c = jax.random.split(jax.random.PRNGKey(0), 2)
    features = jax.random.normal(k_f, (batch, embed_size), jnp.float32)
    captions = jax.random.randint(k_c, (batch, cap_len), 0, vocab_size, jnp.int32)

    # Run the Pallas forward.
    out = decoder_rnn_forward(params, features, captions, lengths)
    out = jax.block_until_ready(out)
    assert out.shape == (sum(lengths), vocab_size)

    # Correctness vs a pure-f32 JAX reference (kernel matmuls use bf16 operands
    # with f32 accumulation -> slightly looser tolerance).
    embeddings_ref = jnp.concatenate([features[:, None, :], embed_w[captions]], axis=1)
    hid_ref = _lstm_ref(jnp.transpose(embeddings_ref, (1, 0, 2)), lstm_params)
    idx_t, idx_b = [], []
    for t in range(cap_len + 1):
        for b in range(batch):
            if lengths[b] > t:
                idx_t.append(t)
                idx_b.append(b)
    packed_ref = hid_ref[jnp.asarray(idx_t), jnp.asarray(idx_b)]
    out_ref = packed_ref @ linear_w + linear_b
    np.testing.assert_allclose(np.asarray(out), np.asarray(out_ref), rtol=2e-2, atol=2e-2)

    print("KERNEL_OK")
</pallas_src>

<mosaic_0001>
module attributes {stable_mosaic.version = 11 : i64} {
  func.func @kernel(%arg0: memref<72x32xbf16, #tpu.memory_space<vmem>>, %arg1: memref<32x128xbf16, #tpu.memory_space<vmem>>, %arg2: memref<32x128xbf16, #tpu.memory_space<vmem>>, %arg3: memref<1x128xf32, #tpu.memory_space<vmem>>, %arg4: memref<32x128xbf16, #tpu.memory_space<vmem>>, %arg5: memref<32x128xbf16, #tpu.memory_space<vmem>>, %arg6: memref<1x128xf32, #tpu.memory_space<vmem>>, %arg7: memref<72x32xf32, #tpu.memory_space<vmem>>, %arg8: memref<72x128xf32, #tpu.memory_space<vmem>>) attributes {dimension_semantics = [], scalar_prefetch = 0 : i64, scratch_operands = 1 : i64, tpu.core_type = #tpu.core_type<tc>} {
    %c0 = arith.constant 0 : index
    %c0_0 = arith.constant 0 : index
    %0 = vector.load %arg1[%c0, %c0_0] : memref<32x128xbf16, #tpu.memory_space<vmem>>, vector<32x128xbf16>
    %c0_1 = arith.constant 0 : index
    %c0_2 = arith.constant 0 : index
    %1 = vector.load %arg4[%c0_1, %c0_2] : memref<32x128xbf16, #tpu.memory_space<vmem>>, vector<32x128xbf16>
    %c0_3 = arith.constant 0 : index
    %c0_4 = arith.constant 0 : index
    %2 = vector.load %arg2[%c0_3, %c0_4] : memref<32x128xbf16, #tpu.memory_space<vmem>>, vector<32x128xbf16>
    %c0_5 = arith.constant 0 : index
    %c0_6 = arith.constant 0 : index
    %3 = vector.load %arg5[%c0_5, %c0_6] : memref<32x128xbf16, #tpu.memory_space<vmem>>, vector<32x128xbf16>
    %c0_7 = arith.constant 0 : index
    %c0_8 = arith.constant 0 : index
    %4 = vector.load %arg3[%c0_7, %c0_8] : memref<1x128xf32, #tpu.memory_space<vmem>>, vector<1x128xf32>
    %c0_9 = arith.constant 0 : index
    %c0_10 = arith.constant 0 : index
    %5 = vector.load %arg6[%c0_9, %c0_10] : memref<1x128xf32, #tpu.memory_space<vmem>>, vector<1x128xf32>
    %c0_11 = arith.constant 0 : index
    %c0_12 = arith.constant 0 : index
    %6 = vector.load %arg0[%c0_11, %c0_12] : memref<72x32xbf16, #tpu.memory_space<vmem>>, vector<72x32xbf16>
    %cst = arith.constant dense<0.000000e+00> : vector<72x128xf32>
    %7 = tpu.matmul %6, %0, %cst {dimension_numbers = #tpu.dot_dimension_numbers<[1], [0], [0], [1], [0, 0, 1, 1], [], []>} : vector<72x32xbf16>, vector<32x128xbf16>, vector<72x128xf32> -> vector<72x128xf32>
    %8 = vector.broadcast %4 : vector<1x128xf32> to vector<72x128xf32>
    %9 = arith.addf %7, %8 : vector<72x128xf32>
    %c0_13 = arith.constant 0 : index
    %c0_14 = arith.constant 0 : index
    %10 = vector.load %arg8[%c0_13, %c0_14] : memref<72x128xf32, #tpu.memory_space<vmem>>, vector<72x128xf32>
    tpu.vector_store %arg8[%c0_13, %c0_14], %9 {strides = array<i32>} : memref<72x128xf32, #tpu.memory_space<vmem>>, vector<72x128xf32>,
    %cst_15 = arith.constant 0.000000e+00 : f32
    %11 = vector.broadcast %cst_15 : f32 to vector<8x32xf32>
    %cst_16 = arith.constant 0.000000e+00 : f32
    %12 = vector.broadcast %cst_16 : f32 to vector<8x32xf32>
    %cst_17 = arith.constant 0.000000e+00 : f32
    %13 = vector.broadcast %cst_17 : f32 to vector<8x32xf32>
    %cst_18 = arith.constant 0.000000e+00 : f32
    %14 = vector.broadcast %cst_18 : f32 to vector<8x32xf32>
    %c0_19 = arith.constant 0 : index
    %c0_20 = arith.constant 0 : index
    %15 = vector.load %arg8[%c0_19, %c0_20] : memref<72x128xf32, #tpu.memory_space<vmem>>, vector<8x128xf32>
    %16 = arith.truncf %11 : vector<8x32xf32> to vector<8x32xbf16>
    %cst_21 = arith.constant dense<0.000000e+00> : vector<8x128xf32>
    %17 = tpu.matmul %16, %2, %cst_21 {dimension_numbers = #tpu.dot_dimension_numbers<[1], [0], [0], [1], [0, 0, 1, 1], [], []>} : vector<8x32xbf16>, vector<32x128xbf16>, vector<8x128xf32> -> vector<8x128xf32>
    %18 = arith.addf %15, %17 : vector<8x128xf32>
    %19 = arith.negf %18 : vector<8x128xf32>
    %20 = math.exp %19 : vector<8x128xf32>
    %cst_22 = arith.constant 1.000000e+00 : f32
    %21 = vector.broadcast %cst_22 : f32 to vector<8x128xf32>
    %22 = arith.addf %21, %20 : vector<8x128xf32>
    %23 = arith.divf %21, %22 : vector<8x128xf32>
    %24 = vector.extract_strided_slice %23 {offsets = [0, 0], sizes = [8, 32], strides = [1, 1]} : vector<8x128xf32> to vector<8x32xf32>
    %25 = vector.extract_strided_slice %23 {offsets = [0, 32], sizes = [8, 32], strides = [1, 1]} : vector<8x128xf32> to vector<8x32xf32>
    %26 = vector.extract_strided_slice %23 {offsets = [0, 64], sizes = [8, 32], strides = [1, 1]} : vector<8x128xf32> to vector<8x32xf32>
    %27 = vector.extract_strided_slice %18 {offsets = [0, 96], sizes = [8, 32], strides = [1, 1]} : vector<8x128xf32> to vector<8x32xf32>
    %28 = math.tanh %27 : vector<8x32xf32>
    %29 = arith.mulf %25, %13 : vector<8x32xf32>
    %30 = arith.mulf %24, %28 : vector<8x32xf32>
    %31 = arith.addf %29, %30 : vector<8x32xf32>
    %32 = math.tanh %31 : vector<8x32xf32>
    %33 = arith.mulf %26, %32 : vector<8x32xf32>
    %34 = arith.truncf %33 : vector<8x32xf32> to vector<8x32xbf16>
    %cst_23 = arith.constant dense<0.000000e+00> : vector<8x128xf32>
    %35 = tpu.matmul %34, %1, %cst_23 {dimension_numbers = #tpu.dot_dimension_numbers<[1], [0], [0], [1], [0, 0, 1, 1], [], []>} : vector<8x32xbf16>, vector<32x128xbf16>, vector<8x128xf32> -> vector<8x128xf32>
    %36 = arith.truncf %12 : vector<8x32xf32> to vector<8x32xbf16>
    %cst_24 = arith.constant dense<0.000000e+00> : vector<8x128xf32>
    %37 = tpu.matmul %36, %3, %cst_24 {dimension_numbers = #tpu.dot_dimension_numbers<[1], [0], [0], [1], [0, 0, 1, 1], [], []>} : vector<8x32xbf16>, vector<32x128xbf16>, vector<8x128xf32> -> vector<8x128xf32>
    %38 = arith.addf %35, %37 : vector<8x128xf32>
    %39 = vector.broadcast %5 : vector<1x128xf32> to vector<8x128xf32>
    %40 = arith.addf %38, %39 : vector<8x128xf32>
    %41 = arith.negf %40 : vector<8x128xf32>
    %42 = math.exp %41 : vector<8x128xf32>
    %cst_25 = arith.constant 1.000000e+00 : f32
    %43 = vector.broadcast %cst_25 : f32 to vector<8x128xf32>
    %44 = arith.addf %43, %42 : vector<8x128xf32>
    %45 = arith.divf %43, %44 : vector<8x128xf32>
    %46 = vector.extract_strided_slice %45 {offsets = [0, 0], sizes = [8, 32], strides = [1, 1]} : vector<8x128xf32> to vector<8x32xf32>
    %47 = vector.extract_strided_slice %45 {offsets = [0, 32], sizes = [8, 32], strides = [1, 1]} : vector<8x128xf32> to vector<8x32xf32>
    %48 = vector.extract_strided_slice %45 {offsets = [0, 64], sizes = [8, 32], strides = [1, 1]} : vector<8x128xf32> to vector<8x32xf32>
    %49 = vector.extract_strided_slice %40 {offsets = [0, 96], sizes = [8, 32], strides = [1, 1]} : vector<8x128xf32> to vector<8x32xf32>
    %50 = math.tanh %49 : vector<8x32xf32>
    %51 = arith.mulf %47, %14 : vector<8x32xf32>
    %52 = arith.mulf %46, %50 : vector<8x32xf32>
    %53 = arith.addf %51, %52 : vector<8x32xf32>
    %54 = math.tanh %53 : vector<8x32xf32>
    %55 = arith.mulf %48, %54 : vector<8x32xf32>
    %c0_26 = arith.constant 0 : index
    %c0_27 = arith.constant 0 : index
    %56 = vector.load %arg7[%c0_26, %c0_27] : memref<72x32xf32, #tpu.memory_space<vmem>>, vector<8x32xf32>
    tpu.vector_store %arg7[%c0_26, %c0_27], %55 {strides = array<i32>} : memref<72x32xf32, #tpu.memory_space<vmem>>, vector<8x32xf32>,
    %c8 = arith.constant 8 : index
    %c0_28 = arith.constant 0 : index
    %57 = vector.load %arg8[%c8, %c0_28] : memref<72x128xf32, #tpu.memory_space<vmem>>, vector<8x128xf32>
    %58 = arith.truncf %33 : vector<8x32xf32> to vector<8x32xbf16>
    %cst_29 = arith.constant dense<0.000000e+00> : vector<8x128xf32>
    %59 = tpu.matmul %58, %2, %cst_29 {dimension_numbers = #tpu.dot_dimension_numbers<[1], [0], [0], [1], [0, 0, 1, 1], [], []>} : vector<8x32xbf16>, vector<32x128xbf16>, vector<8x128xf32> -> vector<8x128xf32>
    %60 = arith.addf %57, %59 : vector<8x128xf32>
    %61 = arith.negf %60 : vector<8x128xf32>
    %62 = math.exp %61 : vector<8x128xf32>
    %cst_30 = arith.constant 1.000000e+00 : f32
    %63 = vector.broadcast %cst_30 : f32 to vector<8x128xf32>
    %64 = arith.addf %63, %62 : vector<8x128xf32>
    %65 = arith.divf %63, %64 : vector<8x128xf32>
    %66 = vector.extract_strided_slice %65 {offsets = [0, 0], sizes = [8, 32], strides = [1, 1]} : vector<8x128xf32> to vector<8x32xf32>
    %67 = vector.extract_strided_slice %65 {offsets = [0, 32], sizes = [8, 32], strides = [1, 1]} : vector<8x128xf32> to vector<8x32xf32>
    %68 = vector.extract_strided_slice %65 {offsets = [0, 64], sizes = [8, 32], strides = [1, 1]} : vector<8x128xf32> to vector<8x32xf32>
    %69 = vector.extract_strided_slice %60 {offsets = [0, 96], sizes = [8, 32], strides = [1, 1]} : vector<8x128xf32> to vector<8x32xf32>
    %70 = math.tanh %69 : vector<8x32xf32>
    %71 = arith.mulf %67, %31 : vector<8x32xf32>
    %72 = arith.mulf %66, %70 : vector<8x32xf32>
    %73 = arith.addf %71, %72 : vector<8x32xf32>
    %74 = math.tanh %73 : vector<8x32xf32>
    %75 = arith.mulf %68, %74 : vector<8x32xf32>
    %76 = arith.truncf %75 : vector<8x32xf32> to vector<8x32xbf16>
    %cst_31 = arith.constant dense<0.000000e+00> : vector<8x128xf32>
    %77 = tpu.matmul %76, %1, %cst_31 {dimension_numbers = #tpu.dot_dimension_numbers<[1], [0], [0], [1], [0, 0, 1, 1], [], []>} : vector<8x32xbf16>, vector<32x128xbf16>, vector<8x128xf32> -> vector<8x128xf32>
    %78 = arith.truncf %55 : vector<8x32xf32> to vector<8x32xbf16>
    %cst_32 = arith.constant dense<0.000000e+00> : vector<8x128xf32>
    %79 = tpu.matmul %78, %3, %cst_32 {dimension_numbers = #tpu.dot_dimension_numbers<[1], [0], [0], [1], [0, 0, 1, 1], [], []>} : vector<8x32xbf16>, vector<32x128xbf16>, vector<8x128xf32> -> vector<8x128xf32>
    %80 = arith.addf %77, %79 : vector<8x128xf32>
    %81 = vector.broadcast %5 : vector<1x128xf32> to vector<8x128xf32>
    %82 = arith.addf %80, %81 : vector<8x128xf32>
    %83 = arith.negf %82 : vector<8x128xf32>
    %84 = math.exp %83 : vector<8x128xf32>
    %cst_33 = arith.constant 1.000000e+00 : f32
    %85 = vector.broadcast %cst_33 : f32 to vector<8x128xf32>
    %86 = arith.addf %85, %84 : vector<8x128xf32>
    %87 = arith.divf %85, %86 : vector<8x128xf32>
    %88 = vector.extract_strided_slice %87 {offsets = [0, 0], sizes = [8, 32], strides = [1, 1]} : vector<8x128xf32> to vector<8x32xf32>
    %89 = vector.extract_strided_slice %87 {offsets = [0, 32], sizes = [8, 32], strides = [1, 1]} : vector<8x128xf32> to vector<8x32xf32>
    %90 = vector.extract_strided_slice %87 {offsets = [0, 64], sizes = [8, 32], strides = [1, 1]} : vector<8x128xf32> to vector<8x32xf32>
    %91 = vector.extract_strided_slice %82 {offsets = [0, 96], sizes = [8, 32], strides = [1, 1]} : vector<8x128xf32> to vector<8x32xf32>
    %92 = math.tanh %91 : vector<8x32xf32>
    %93 = arith.mulf %89, %53 : vector<8x32xf32>
    %94 = arith.mulf %88, %92 : vector<8x32xf32>
    %95 = arith.addf %93, %94 : vector<8x32xf32>
    %96 = math.tanh %95 : vector<8x32xf32>
    %97 = arith.mulf %90, %96 : vector<8x32xf32>
    %c8_34 = arith.constant 8 : index
    %c0_35 = arith.constant 0 : index
    %98 = vector.load %arg7[%c8_34, %c0_35] : memref<72x32xf32, #tpu.memory_space<vmem>>, vector<8x32xf32>
    tpu.vector_store %arg7[%c8_34, %c0_35], %97 {strides = array<i32>} : memref<72x32xf32, #tpu.memory_space<vmem>>, vector<8x32xf32>,
    %c16 = arith.constant 16 : index
    %c0_36 = arith.constant 0 : index
    %99 = vector.load %arg8[%c16, %c0_36] : memref<72x128xf32, #tpu.memory_space<vmem>>, vector<8x128xf32>
    %100 = arith.truncf %75 : vector<8x32xf32> to vector<8x32xbf16>
    %cst_37 = arith.constant dense<0.000000e+00> : vector<8x128xf32>
    %101 = tpu.matmul %100, %2, %cst_37 {dimension_numbers = #tpu.dot_dimension_numbers<[1], [0], [0], [1], [0, 0, 1, 1], [], []>} : vector<8x32xbf16>, vector<32x128xbf16>, vector<8x128xf32> -> vector<8x128xf32>
    %102 = arith.addf %99, %101 : vector<8x128xf32>
    %103 = arith.negf %102 : vector<8x128xf32>
    %104 = math.exp %103 : vector<8x128xf32>
    %cst_38 = arith.constant 1.000000e+00 : f32
    %105 = vector.broadcast %cst_38 : f32 to vector<8x128xf32>
    %106 = arith.addf %105, %104 : vector<8x128xf32>
    %107 = arith.divf %105, %106 : vector<8x128xf32>
    %108 = vector.extract_strided_slice %107 {offsets = [0, 0], sizes = [8, 32], strides = [1, 1]} : vector<8x128xf32> to vector<8x32xf32>
    %109 = vector.extract_strided_slice %107 {offsets = [0, 32], sizes = [8, 32], strides = [1, 1]} : vector<8x128xf32> to vector<8x32xf32>
    %110 = vector.extract_strided_slice %107 {offsets = [0, 64], sizes = [8, 32], strides = [1, 1]} : vector<8x128xf32> to vector<8x32xf32>
    %111 = vector.extract_strided_slice %102 {offsets = [0, 96], sizes = [8, 32], strides = [1, 1]} : vector<8x128xf32> to vector<8x32xf32>
    %112 = math.tanh %111 : vector<8x32xf32>
    %113 = arith.mulf %109, %73 : vector<8x32xf32>
    %114 = arith.mulf %108, %112 : vector<8x32xf32>
    %115 = arith.addf %113, %114 : vector<8x32xf32>
    %116 = math.tanh %115 : vector<8x32xf32>
    %117 = arith.mulf %110, %116 : vector<8x32xf32>
    %118 = arith.truncf %117 : vector<8x32xf32> to vector<8x32xbf16>
    %cst_39 = arith.constant dense<0.000000e+00> : vector<8x128xf32>
    %119 = tpu.matmul %118, %1, %cst_39 {dimension_numbers = #tpu.dot_dimension_numbers<[1], [0], [0], [1], [0, 0, 1, 1], [], []>} : vector<8x32xbf16>, vector<32x128xbf16>, vector<8x128xf32> -> vector<8x128xf32>
    %120 = arith.truncf %97 : vector<8x32xf32> to vector<8x32xbf16>
    %cst_40 = arith.constant dense<0.000000e+00> : vector<8x128xf32>
    %121 = tpu.matmul %120, %3, %cst_40 {dimension_numbers = #tpu.dot_dimension_numbers<[1], [0], [0], [1], [0, 0, 1, 1], [], []>} : vector<8x32xbf16>, vector<32x128xbf16>, vector<8x128xf32> -> vector<8x128xf32>
    %122 = arith.addf %119, %121 : vector<8x128xf32>
    %123 = vector.broadcast %5 : vector<1x128xf32> to vector<8x128xf32>
    %124 = arith.addf %122, %123 : vector<8x128xf32>
    %125 = arith.negf %124 : vector<8x128xf32>
    %126 = math.exp %125 : vector<8x128xf32>
    %cst_41 = arith.constant 1.000000e+00 : f32
    %127 = vector.broadcast %cst_41 : f32 to vector<8x128xf32>
    %128 = arith.addf %127, %126 : vector<8x128xf32>
    %129 = arith.divf %127, %128 : vector<8x128xf32>
    %130 = vector.extract_strided_slice %129 {offsets = [0, 0], sizes = [8, 32], strides = [1, 1]} : vector<8x128xf32> to vector<8x32xf32>
    %131 = vector.extract_strided_slice %129 {offsets = [0, 32], sizes = [8, 32], strides = [1, 1]} : vector<8x128xf32> to vector<8x32xf32>
    %132 = vector.extract_strided_slice %129 {offsets = [0, 64], sizes = [8, 32], strides = [1, 1]} : vector<8x128xf32> to vector<8x32xf32>
    %133 = vector.extract_strided_slice %124 {offsets = [0, 96], sizes = [8, 32], strides = [1, 1]} : vector<8x128xf32> to vector<8x32xf32>
    %134 = math.tanh %133 : vector<8x32xf32>
    %135 = arith.mulf %131, %95 : vector<8x32xf32>
    %136 = arith.mulf %130, %134 : vector<8x32xf32>
    %137 = arith.addf %135, %136 : vector<8x32xf32>
    %138 = math.tanh %137 : vector<8x32xf32>
    %139 = arith.mulf %132, %138 : vector<8x32xf32>
    %c16_42 = arith.constant 16 : index
    %c0_43 = arith.constant 0 : index
    %140 = vector.load %arg7[%c16_42, %c0_43] : memref<72x32xf32, #tpu.memory_space<vmem>>, vector<8x32xf32>
    tpu.vector_store %arg7[%c16_42, %c0_43], %139 {strides = array<i32>} : memref<72x32xf32, #tpu.memory_space<vmem>>, vector<8x32xf32>,
    %c24 = arith.constant 24 : index
    %c0_44 = arith.constant 0 : index
    %141 = vector.load %arg8[%c24, %c0_44] : memref<72x128xf32, #tpu.memory_space<vmem>>, vector<8x128xf32>
    %142 = arith.truncf %117 : vector<8x32xf32> to vector<8x32xbf16>
    %cst_45 = arith.constant dense<0.000000e+00> : vector<8x128xf32>
    %143 = tpu.matmul %142, %2, %cst_45 {dimension_numbers = #tpu.dot_dimension_numbers<[1], [0], [0], [1], [0, 0, 1, 1], [], []>} : vector<8x32xbf16>, vector<32x128xbf16>, vector<8x128xf32> -> vector<8x128xf32>
    %144 = arith.addf %141, %143 : vector<8x128xf32>
    %145 = arith.negf %144 : vector<8x128xf32>
    %146 = math.exp %145 : vector<8x128xf32>
    %cst_46 = arith.constant 1.000000e+00 : f32
    %147 = vector.broadcast %cst_46 : f32 to vector<8x128xf32>
    %148 = arith.addf %147, %146 : vector<8x128xf32>
    %149 = arith.divf %147, %148 : vector<8x128xf32>
    %150 = vector.extract_strided_slice %149 {offsets = [0, 0], sizes = [8, 32], strides = [1, 1]} : vector<8x128xf32> to vector<8x32xf32>
    %151 = vector.extract_strided_slice %149 {offsets = [0, 32], sizes = [8, 32], strides = [1, 1]} : vector<8x128xf32> to vector<8x32xf32>
    %152 = vector.extract_strided_slice %149 {offsets = [0, 64], sizes = [8, 32], strides = [1, 1]} : vector<8x128xf32> to vector<8x32xf32>
    %153 = vector.extract_strided_slice %144 {offsets = [0, 96], sizes = [8, 32], strides = [1, 1]} : vector<8x128xf32> to vector<8x32xf32>
    %154 = math.tanh %153 : vector<8x32xf32>
    %155 = arith.mulf %151, %115 : vector<8x32xf32>
    %156 = arith.mulf %150, %154 : vector<8x32xf32>
    %157 = arith.addf %155, %156 : vector<8x32xf32>
    %158 = math.tanh %157 : vector<8x32xf32>
    %159 = arith.mulf %152, %158 : vector<8x32xf32>
    %160 = arith.truncf %159 : vector<8x32xf32> to vector<8x32xbf16>
    %cst_47 = arith.constant dense<0.000000e+00> : vector<8x128xf32>
    %161 = tpu.matmul %160, %1, %cst_47 {dimension_numbers = #tpu.dot_dimension_numbers<[1], [0], [0], [1], [0, 0, 1, 1], [], []>} : vector<8x32xbf16>, vector<32x128xbf16>, vector<8x128xf32> -> vector<8x128xf32>
    %162 = arith.truncf %139 : vector<8x32xf32> to vector<8x32xbf16>
    %cst_48 = arith.constant dense<0.000000e+00> : vector<8x128xf32>
    %163 = tpu.matmul %162, %3, %cst_48 {dimension_numbers = #tpu.dot_dimension_numbers<[1], [0], [0], [1], [0, 0, 1, 1], [], []>} : vector<8x32xbf16>, vector<32x128xbf16>, vector<8x128xf32> -> vector<8x128xf32>
    %164 = arith.addf %161, %163 : vector<8x128xf32>
    %165 = vector.broadcast %5 : vector<1x128xf32> to vector<8x128xf32>
    %166 = arith.addf %164, %165 : vector<8x128xf32>
    %167 = arith.negf %166 : vector<8x128xf32>
    %168 = math.exp %167 : vector<8x128xf32>
    %cst_49 = arith.constant 1.000000e+00 : f32
    %169 = vector.broadcast %cst_49 : f32 to vector<8x128xf32>
    %170 = arith.addf %169, %168 : vector<8x128xf32>
    %171 = arith.divf %169, %170 : vector<8x128xf32>
    %172 = vector.extract_strided_slice %171 {offsets = [0, 0], sizes = [8, 32], strides = [1, 1]} : vector<8x128xf32> to vector<8x32xf32>
    %173 = vector.extract_strided_slice %171 {offsets = [0, 32], sizes = [8, 32], strides = [1, 1]} : vector<8x128xf32> to vector<8x32xf32>
    %174 = vector.extract_strided_slice %171 {offsets = [0, 64], sizes = [8, 32], strides = [1, 1]} : vector<8x128xf32> to vector<8x32xf32>
    %175 = vector.extract_strided_slice %166 {offsets = [0, 96], sizes = [8, 32], strides = [1, 1]} : vector<8x128xf32> to vector<8x32xf32>
    %176 = math.tanh %175 : vector<8x32xf32>
    %177 = arith.mulf %173, %137 : vector<8x32xf32>
    %178 = arith.mulf %172, %176 : vector<8x32xf32>
    %179 = arith.addf %177, %178 : vector<8x32xf32>
    %180 = math.tanh %179 : vector<8x32xf32>
    %181 = arith.mulf %174, %180 : vector<8x32xf32>
    %c24_50 = arith.constant 24 : index
    %c0_51 = arith.constant 0 : index
    %182 = vector.load %arg7[%c24_50, %c0_51] : memref<72x32xf32, #tpu.memory_space<vmem>>, vector<8x32xf32>
    tpu.vector_store %arg7[%c24_50, %c0_51], %181 {strides = array<i32>} : memref<72x32xf32, #tpu.memory_space<vmem>>, vector<8x32xf32>,
    %c32 = arith.constant 32 : index
    %c0_52 = arith.constant 0 : index
    %183 = vector.load %arg8[%c32, %c0_52] : memref<72x128xf32, #tpu.memory_space<vmem>>, vector<8x128xf32>
    %184 = arith.truncf %159 : vector<8x32xf32> to vector<8x32xbf16>
    %cst_53 = arith.constant dense<0.000000e+00> : vector<8x128xf32>
    %185 = tpu.matmul %184, %2, %cst_53 {dimension_numbers = #tpu.dot_dimension_numbers<[1], [0], [0], [1], [0, 0, 1, 1], [], []>} : vector<8x32xbf16>, vector<32x128xbf16>, vector<8x128xf32> -> vector<8x128xf32>
    %186 = arith.addf %183, %185 : vector<8x128xf32>
    %187 = arith.negf %186 : vector<8x128xf32>
    %188 = math.exp %187 : vector<8x128xf32>
    %cst_54 = arith.constant 1.000000e+00 : f32
    %189 = vector.broadcast %cst_54 : f32 to vector<8x128xf32>
    %190 = arith.addf %189, %188 : vector<8x128xf32>
    %191 = arith.divf %189, %190 : vector<8x128xf32>
    %192 = vector.extract_strided_slice %191 {offsets = [0, 0], sizes = [8, 32], strides = [1, 1]} : vector<8x128xf32> to vector<8x32xf32>
    %193 = vector.extract_strided_slice %191 {offsets = [0, 32], sizes = [8, 32], strides = [1, 1]} : vector<8x128xf32> to vector<8x32xf32>
    %194 = vector.extract_strided_slice %191 {offsets = [0, 64], sizes = [8, 32], strides = [1, 1]} : vector<8x128xf32> to vector<8x32xf32>
    %195 = vector.extract_strided_slice %186 {offsets = [0, 96], sizes = [8, 32], strides = [1, 1]} : vector<8x128xf32> to vector<8x32xf32>
    %196 = math.tanh %195 : vector<8x32xf32>
    %197 = arith.mulf %193, %157 : vector<8x32xf32>
    %198 = arith.mulf %192, %196 : vector<8x32xf32>
    %199 = arith.addf %197, %198 : vector<8x32xf32>
    %200 = math.tanh %199 : vector<8x32xf32>
    %201 = arith.mulf %194, %200 : vector<8x32xf32>
    %202 = arith.truncf %201 : vector<8x32xf32> to vector<8x32xbf16>
    %cst_55 = arith.constant dense<0.000000e+00> : vector<8x128xf32>
    %203 = tpu.matmul %202, %1, %cst_55 {dimension_numbers = #tpu.dot_dimension_numbers<[1], [0], [0], [1], [0, 0, 1, 1], [], []>} : vector<8x32xbf16>, vector<32x128xbf16>, vector<8x128xf32> -> vector<8x128xf32>
    %204 = arith.truncf %181 : vector<8x32xf32> to vector<8x32xbf16>
    %cst_56 = arith.constant dense<0.000000e+00> : vector<8x128xf32>
    %205 = tpu.matmul %204, %3, %cst_56 {dimension_numbers = #tpu.dot_dimension_numbers<[1], [0], [0], [1], [0, 0, 1, 1], [], []>} : vector<8x32xbf16>, vector<32x128xbf16>, vector<8x128xf32> -> vector<8x128xf32>
    %206 = arith.addf %203, %205 : vector<8x128xf32>
    %207 = vector.broadcast %5 : vector<1x128xf32> to vector<8x128xf32>
    %208 = arith.addf %206, %207 : vector<8x128xf32>
    %209 = arith.negf %208 : vector<8x128xf32>
    %210 = math.exp %209 : vector<8x128xf32>
    %cst_57 = arith.constant 1.000000e+00 : f32
    %211 = vector.broadcast %cst_57 : f32 to vector<8x128xf32>
    %212 = arith.addf %211, %210 : vector<8x128xf32>
    %213 = arith.divf %211, %212 : vector<8x128xf32>
    %214 = vector.extract_strided_slice %213 {offsets = [0, 0], sizes = [8, 32], strides = [1, 1]} : vector<8x128xf32> to vector<8x32xf32>
    %215 = vector.extract_strided_slice %213 {offsets = [0, 32], sizes = [8, 32], strides = [1, 1]} : vector<8x128xf32> to vector<8x32xf32>
    %216 = vector.extract_strided_slice %213 {offsets = [0, 64], sizes = [8, 32], strides = [1, 1]} : vector<8x128xf32> to vector<8x32xf32>
    %217 = vector.extract_strided_slice %208 {offsets = [0, 96], sizes = [8, 32], strides = [1, 1]} : vector<8x128xf32> to vector<8x32xf32>
    %218 = math.tanh %217 : vector<8x32xf32>
    %219 = arith.mulf %215, %179 : vector<8x32xf32>
    %220 = arith.mulf %214, %218 : vector<8x32xf32>
    %221 = arith.addf %219, %220 : vector<8x32xf32>
    %222 = math.tanh %221 : vector<8x32xf32>
    %223 = arith.mulf %216, %222 : vector<8x32xf32>
    %c32_58 = arith.constant 32 : index
    %c0_59 = arith.constant 0 : index
    %224 = vector.load %arg7[%c32_58, %c0_59] : memref<72x32xf32, #tpu.memory_space<vmem>>, vector<8x32xf32>
    tpu.vector_store %arg7[%c32_58, %c0_59], %223 {strides = array<i32>} : memref<72x32xf32, #tpu.memory_space<vmem>>, vector<8x32xf32>,
    %c40 = arith.constant 40 : index
    %c0_60 = arith.constant 0 : index
    %225 = vector.load %arg8[%c40, %c0_60] : memref<72x128xf32, #tpu.memory_space<vmem>>, vector<8x128xf32>
    %226 = arith.truncf %201 : vector<8x32xf32> to vector<8x32xbf16>
    %cst_61 = arith.constant dense<0.000000e+00> : vector<8x128xf32>
    %227 = tpu.matmul %226, %2, %cst_61 {dimension_numbers = #tpu.dot_dimension_numbers<[1], [0], [0], [1], [0, 0, 1, 1], [], []>} : vector<8x32xbf16>, vector<32x128xbf16>, vector<8x128xf32> -> vector<8x128xf32>
    %228 = arith.addf %225, %227 : vector<8x128xf32>
    %229 = arith.negf %228 : vector<8x128xf32>
    %230 = math.exp %229 : vector<8x128xf32>
    %cst_62 = arith.constant 1.000000e+00 : f32
    %231 = vector.broadcast %cst_62 : f32 to vector<8x128xf32>
    %232 = arith.addf %231, %230 : vector<8x128xf32>
    %233 = arith.divf %231, %232 : vector<8x128xf32>
    %234 = vector.extract_strided_slice %233 {offsets = [0, 0], sizes = [8, 32], strides = [1, 1]} : vector<8x128xf32> to vector<8x32xf32>
    %235 = vector.extract_strided_slice %233 {offsets = [0, 32], sizes = [8, 32], strides = [1, 1]} : vector<8x128xf32> to vector<8x32xf32>
    %236 = vector.extract_strided_slice %233 {offsets = [0, 64], sizes = [8, 32], strides = [1, 1]} : vector<8x128xf32> to vector<8x32xf32>
    %237 = vector.extract_strided_slice %228 {offsets = [0, 96], sizes = [8, 32], strides = [1, 1]} : vector<8x128xf32> to vector<8x32xf32>
    %238 = math.tanh %237 : vector<8x32xf32>
    %239 = arith.mulf %235, %199 : vector<8x32xf32>
    %240 = arith.mulf %234, %238 : vector<8x32xf32>
    %241 = arith.addf %239, %240 : vector<8x32xf32>
    %242 = math.tanh %241 : vector<8x32xf32>
    %243 = arith.mulf %236, %242 : vector<8x32xf32>
    %244 = arith.truncf %243 : vector<8x32xf32> to vector<8x32xbf16>
    %cst_63 = arith.constant dense<0.000000e+00> : vector<8x128xf32>
    %245 = tpu.matmul %244, %1, %cst_63 {dimension_numbers = #tpu.dot_dimension_numbers<[1], [0], [0], [1], [0, 0, 1, 1], [], []>} : vector<8x32xbf16>, vector<32x128xbf16>, vector<8x128xf32> -> vector<8x128xf32>
    %246 = arith.truncf %223 : vector<8x32xf32> to vector<8x32xbf16>
    %cst_64 = arith.constant dense<0.000000e+00> : vector<8x128xf32>
    %247 = tpu.matmul %246, %3, %cst_64 {dimension_numbers = #tpu.dot_dimension_numbers<[1], [0], [0], [1], [0, 0, 1, 1], [], []>} : vector<8x32xbf16>, vector<32x128xbf16>, vector<8x128xf32> -> vector<8x128xf32>
    %248 = arith.addf %245, %247 : vector<8x128xf32>
    %249 = vector.broadcast %5 : vector<1x128xf32> to vector<8x128xf32>
    %250 = arith.addf %248, %249 : vector<8x128xf32>
    %251 = arith.negf %250 : vector<8x128xf32>
    %252 = math.exp %251 : vector<8x128xf32>
    %cst_65 = arith.constant 1.000000e+00 : f32
    %253 = vector.broadcast %cst_65 : f32 to vector<8x128xf32>
    %254 = arith.addf %253, %252 : vector<8x128xf32>
    %255 = arith.divf %253, %254 : vector<8x128xf32>
    %256 = vector.extract_strided_slice %255 {offsets = [0, 0], sizes = [8, 32], strides = [1, 1]} : vector<8x128xf32> to vector<8x32xf32>
    %257 = vector.extract_strided_slice %255 {offsets = [0, 32], sizes = [8, 32], strides = [1, 1]} : vector<8x128xf32> to vector<8x32xf32>
    %258 = vector.extract_strided_slice %255 {offsets = [0, 64], sizes = [8, 32], strides = [1, 1]} : vector<8x128xf32> to vector<8x32xf32>
    %259 = vector.extract_strided_slice %250 {offsets = [0, 96], sizes = [8, 32], strides = [1, 1]} : vector<8x128xf32> to vector<8x32xf32>
    %260 = math.tanh %259 : vector<8x32xf32>
    %261 = arith.mulf %257, %221 : vector<8x32xf32>
    %262 = arith.mulf %256, %260 : vector<8x32xf32>
    %263 = arith.addf %261, %262 : vector<8x32xf32>
    %264 = math.tanh %263 : vector<8x32xf32>
    %265 = arith.mulf %258, %264 : vector<8x32xf32>
    %c40_66 = arith.constant 40 : index
    %c0_67 = arith.constant 0 : index
    %266 = vector.load %arg7[%c40_66, %c0_67] : memref<72x32xf32, #tpu.memory_space<vmem>>, vector<8x32xf32>
    tpu.vector_store %arg7[%c40_66, %c0_67], %265 {strides = array<i32>} : memref<72x32xf32, #tpu.memory_space<vmem>>, vector<8x32xf32>,
    %c48 = arith.constant 48 : index
    %c0_68 = arith.constant 0 : index
    %267 = vector.load %arg8[%c48, %c0_68] : memref<72x128xf32, #tpu.memory_space<vmem>>, vector<8x128xf32>
    %268 = arith.truncf %243 : vector<8x32xf32> to vector<8x32xbf16>
    %cst_69 = arith.constant dense<0.000000e+00> : vector<8x128xf32>
    %269 = tpu.matmul %268, %2, %cst_69 {dimension_numbers = #tpu.dot_dimension_numbers<[1], [0], [0], [1], [0, 0, 1, 1], [], []>} : vector<8x32xbf16>, vector<32x128xbf16>, vector<8x128xf32> -> vector<8x128xf32>
    %270 = arith.addf %267, %269 : vector<8x128xf32>
    %271 = arith.negf %270 : vector<8x128xf32>
    %272 = math.exp %271 : vector<8x128xf32>
    %cst_70 = arith.constant 1.000000e+00 : f32
    %273 = vector.broadcast %cst_70 : f32 to vector<8x128xf32>
    %274 = arith.addf %273, %272 : vector<8x128xf32>
    %275 = arith.divf %273, %274 : vector<8x128xf32>
    %276 = vector.extract_strided_slice %275 {offsets = [0, 0], sizes = [8, 32], strides = [1, 1]} : vector<8x128xf32> to vector<8x32xf32>
    %277 = vector.extract_strided_slice %275 {offsets = [0, 32], sizes = [8, 32], strides = [1, 1]} : vector<8x128xf32> to vector<8x32xf32>
    %278 = vector.extract_strided_slice %275 {offsets = [0, 64], sizes = [8, 32], strides = [1, 1]} : vector<8x128xf32> to vector<8x32xf32>
    %279 = vector.extract_strided_slice %270 {offsets = [0, 96], sizes = [8, 32], strides = [1, 1]} : vector<8x128xf32> to vector<8x32xf32>
    %280 = math.tanh %279 : vector<8x32xf32>
    %281 = arith.mulf %277, %241 : vector<8x32xf32>
    %282 = arith.mulf %276, %280 : vector<8x32xf32>
    %283 = arith.addf %281, %282 : vector<8x32xf32>
    %284 = math.tanh %283 : vector<8x32xf32>
    %285 = arith.mulf %278, %284 : vector<8x32xf32>
    %286 = arith.truncf %285 : vector<8x32xf32> to vector<8x32xbf16>
    %cst_71 = arith.constant dense<0.000000e+00> : vector<8x128xf32>
    %287 = tpu.matmul %286, %1, %cst_71 {dimension_numbers = #tpu.dot_dimension_numbers<[1], [0], [0], [1], [0, 0, 1, 1], [], []>} : vector<8x32xbf16>, vector<32x128xbf16>, vector<8x128xf32> -> vector<8x128xf32>
    %288 = arith.truncf %265 : vector<8x32xf32> to vector<8x32xbf16>
    %cst_72 = arith.constant dense<0.000000e+00> : vector<8x128xf32>
    %289 = tpu.matmul %288, %3, %cst_72 {dimension_numbers = #tpu.dot_dimension_numbers<[1], [0], [0], [1], [0, 0, 1, 1], [], []>} : vector<8x32xbf16>, vector<32x128xbf16>, vector<8x128xf32> -> vector<8x128xf32>
    %290 = arith.addf %287, %289 : vector<8x128xf32>
    %291 = vector.broadcast %5 : vector<1x128xf32> to vector<8x128xf32>
    %292 = arith.addf %290, %291 : vector<8x128xf32>
    %293 = arith.negf %292 : vector<8x128xf32>
    %294 = math.exp %293 : vector<8x128xf32>
    %cst_73 = arith.constant 1.000000e+00 : f32
    %295 = vector.broadcast %cst_73 : f32 to vector<8x128xf32>
    %296 = arith.addf %295, %294 : vector<8x128xf32>
    %297 = arith.divf %295, %296 : vector<8x128xf32>
    %298 = vector.extract_strided_slice %297 {offsets = [0, 0], sizes = [8, 32], strides = [1, 1]} : vector<8x128xf32> to vector<8x32xf32>
    %299 = vector.extract_strided_slice %297 {offsets = [0, 32], sizes = [8, 32], strides = [1, 1]} : vector<8x128xf32> to vector<8x32xf32>
    %300 = vector.extract_strided_slice %297 {offsets = [0, 64], sizes = [8, 32], strides = [1, 1]} : vector<8x128xf32> to vector<8x32xf32>
    %301 = vector.extract_strided_slice %292 {offsets = [0, 96], sizes = [8, 32], strides = [1, 1]} : vector<8x128xf32> to vector<8x32xf32>
    %302 = math.tanh %301 : vector<8x32xf32>
    %303 = arith.mulf %299, %263 : vector<8x32xf32>
    %304 = arith.mulf %298, %302 : vector<8x32xf32>
    %305 = arith.addf %303, %304 : vector<8x32xf32>
    %306 = math.tanh %305 : vector<8x32xf32>
    %307 = arith.mulf %300, %306 : vector<8x32xf32>
    %c48_74 = arith.constant 48 : index
    %c0_75 = arith.constant 0 : index
    %308 = vector.load %arg7[%c48_74, %c0_75] : memref<72x32xf32, #tpu.memory_space<vmem>>, vector<8x32xf32>
    tpu.vector_store %arg7[%c48_74, %c0_75], %307 {strides = array<i32>} : memref<72x32xf32, #tpu.memory_space<vmem>>, vector<8x32xf32>,
    %c56 = arith.constant 56 : index
    %c0_76 = arith.constant 0 : index
    %309 = vector.load %arg8[%c56, %c0_76] : memref<72x128xf32, #tpu.memory_space<vmem>>, vector<8x128xf32>
    %310 = arith.truncf %285 : vector<8x32xf32> to vector<8x32xbf16>
    %cst_77 = arith.constant dense<0.000000e+00> : vector<8x128xf32>
    %311 = tpu.matmul %310, %2, %cst_77 {dimension_numbers = #tpu.dot_dimension_numbers<[1], [0], [0], [1], [0, 0, 1, 1], [], []>} : vector<8x32xbf16>, vector<32x128xbf16>, vector<8x128xf32> -> vector<8x128xf32>
    %312 = arith.addf %309, %311 : vector<8x128xf32>
    %313 = arith.negf %312 : vector<8x128xf32>
    %314 = math.exp %313 : vector<8x128xf32>
    %cst_78 = arith.constant 1.000000e+00 : f32
    %315 = vector.broadcast %cst_78 : f32 to vector<8x128xf32>
    %316 = arith.addf %315, %314 : vector<8x128xf32>
    %317 = arith.divf %315, %316 : vector<8x128xf32>
    %318 = vector.extract_strided_slice %317 {offsets = [0, 0], sizes = [8, 32], strides = [1, 1]} : vector<8x128xf32> to vector<8x32xf32>
    %319 = vector.extract_strided_slice %317 {offsets = [0, 32], sizes = [8, 32], strides = [1, 1]} : vector<8x128xf32> to vector<8x32xf32>
    %320 = vector.extract_strided_slice %317 {offsets = [0, 64], sizes = [8, 32], strides = [1, 1]} : vector<8x128xf32> to vector<8x32xf32>
    %321 = vector.extract_strided_slice %312 {offsets = [0, 96], sizes = [8, 32], strides = [1, 1]} : vector<8x128xf32> to vector<8x32xf32>
    %322 = math.tanh %321 : vector<8x32xf32>
    %323 = arith.mulf %319, %283 : vector<8x32xf32>
    %324 = arith.mulf %318, %322 : vector<8x32xf32>
    %325 = arith.addf %323, %324 : vector<8x32xf32>
    %326 = math.tanh %325 : vector<8x32xf32>
    %327 = arith.mulf %320, %326 : vector<8x32xf32>
    %328 = arith.truncf %327 : vector<8x32xf32> to vector<8x32xbf16>
    %cst_79 = arith.constant dense<0.000000e+00> : vector<8x128xf32>
    %329 = tpu.matmul %328, %1, %cst_79 {dimension_numbers = #tpu.dot_dimension_numbers<[1], [0], [0], [1], [0, 0, 1, 1], [], []>} : vector<8x32xbf16>, vector<32x128xbf16>, vector<8x128xf32> -> vector<8x128xf32>
    %330 = arith.truncf %307 : vector<8x32xf32> to vector<8x32xbf16>
    %cst_80 = arith.constant dense<0.000000e+00> : vector<8x128xf32>
    %331 = tpu.matmul %330, %3, %cst_80 {dimension_numbers = #tpu.dot_dimension_numbers<[1], [0], [0], [1], [0, 0, 1, 1], [], []>} : vector<8x32xbf16>, vector<32x128xbf16>, vector<8x128xf32> -> vector<8x128xf32>
    %332 = arith.addf %329, %331 : vector<8x128xf32>
    %333 = vector.broadcast %5 : vector<1x128xf32> to vector<8x128xf32>
    %334 = arith.addf %332, %333 : vector<8x128xf32>
    %335 = arith.negf %334 : vector<8x128xf32>
    %336 = math.exp %335 : vector<8x128xf32>
    %cst_81 = arith.constant 1.000000e+00 : f32
    %337 = vector.broadcast %cst_81 : f32 to vector<8x128xf32>
    %338 = arith.addf %337, %336 : vector<8x128xf32>
    %339 = arith.divf %337, %338 : vector<8x128xf32>
    %340 = vector.extract_strided_slice %339 {offsets = [0, 0], sizes = [8, 32], strides = [1, 1]} : vector<8x128xf32> to vector<8x32xf32>
    %341 = vector.extract_strided_slice %339 {offsets = [0, 32], sizes = [8, 32], strides = [1, 1]} : vector<8x128xf32> to vector<8x32xf32>
    %342 = vector.extract_strided_slice %339 {offsets = [0, 64], sizes = [8, 32], strides = [1, 1]} : vector<8x128xf32> to vector<8x32xf32>
    %343 = vector.extract_strided_slice %334 {offsets = [0, 96], sizes = [8, 32], strides = [1, 1]} : vector<8x128xf32> to vector<8x32xf32>
    %344 = math.tanh %343 : vector<8x32xf32>
    %345 = arith.mulf %341, %305 : vector<8x32xf32>
    %346 = arith.mulf %340, %344 : vector<8x32xf32>
    %347 = arith.addf %345, %346 : vector<8x32xf32>
    %348 = math.tanh %347 : vector<8x32xf32>
    %349 = arith.mulf %342, %348 : vector<8x32xf32>
    %c56_82 = arith.constant 56 : index
    %c0_83 = arith.constant 0 : index
    %350 = vector.load %arg7[%c56_82, %c0_83] : memref<72x32xf32, #tpu.memory_space<vmem>>, vector<8x32xf32>
    tpu.vector_store %arg7[%c56_82, %c0_83], %349 {strides = array<i32>} : memref<72x32xf32, #tpu.memory_space<vmem>>, vector<8x32xf32>,
    %c64 = arith.constant 64 : index
    %c0_84 = arith.constant 0 : index
    %351 = vector.load %arg8[%c64, %c0_84] : memref<72x128xf32, #tpu.memory_space<vmem>>, vector<8x128xf32>
    %352 = arith.truncf %327 : vector<8x32xf32> to vector<8x32xbf16>
    %cst_85 = arith.constant dense<0.000000e+00> : vector<8x128xf32>
    %353 = tpu.matmul %352, %2, %cst_85 {dimension_numbers = #tpu.dot_dimension_numbers<[1], [0], [0], [1], [0, 0, 1, 1], [], []>} : vector<8x32xbf16>, vector<32x128xbf16>, vector<8x128xf32> -> vector<8x128xf32>
    %354 = arith.addf %351, %353 : vector<8x128xf32>
    %355 = arith.negf %354 : vector<8x128xf32>
    %356 = math.exp %355 : vector<8x128xf32>
    %cst_86 = arith.constant 1.000000e+00 : f32
    %357 = vector.broadcast %cst_86 : f32 to vector<8x128xf32>
    %358 = arith.addf %357, %356 : vector<8x128xf32>
    %359 = arith.divf %357, %358 : vector<8x128xf32>
    %360 = vector.extract_strided_slice %359 {offsets = [0, 0], sizes = [8, 32], strides = [1, 1]} : vector<8x128xf32> to vector<8x32xf32>
    %361 = vector.extract_strided_slice %359 {offsets = [0, 32], sizes = [8, 32], strides = [1, 1]} : vector<8x128xf32> to vector<8x32xf32>
    %362 = vector.extract_strided_slice %359 {offsets = [0, 64], sizes = [8, 32], strides = [1, 1]} : vector<8x128xf32> to vector<8x32xf32>
    %363 = vector.extract_strided_slice %354 {offsets = [0, 96], sizes = [8, 32], strides = [1, 1]} : vector<8x128xf32> to vector<8x32xf32>
    %364 = math.tanh %363 : vector<8x32xf32>
    %365 = arith.mulf %361, %325 : vector<8x32xf32>
    %366 = arith.mulf %360, %364 : vector<8x32xf32>
    %367 = arith.addf %365, %366 : vector<8x32xf32>
    %368 = math.tanh %367 : vector<8x32xf32>
    %369 = arith.mulf %362, %368 : vector<8x32xf32>
    %370 = arith.truncf %369 : vector<8x32xf32> to vector<8x32xbf16>
    %cst_87 = arith.constant dense<0.000000e+00> : vector<8x128xf32>
    %371 = tpu.matmul %370, %1, %cst_87 {dimension_numbers = #tpu.dot_dimension_numbers<[1], [0], [0], [1], [0, 0, 1, 1], [], []>} : vector<8x32xbf16>, vector<32x128xbf16>, vector<8x128xf32> -> vector<8x128xf32>
    %372 = arith.truncf %349 : vector<8x32xf32> to vector<8x32xbf16>
    %cst_88 = arith.constant dense<0.000000e+00> : vector<8x128xf32>
    %373 = tpu.matmul %372, %3, %cst_88 {dimension_numbers = #tpu.dot_dimension_numbers<[1], [0], [0], [1], [0, 0, 1, 1], [], []>} : vector<8x32xbf16>, vector<32x128xbf16>, vector<8x128xf32> -> vector<8x128xf32>
    %374 = arith.addf %371, %373 : vector<8x128xf32>
    %375 = vector.broadcast %5 : vector<1x128xf32> to vector<8x128xf32>
    %376 = arith.addf %374, %375 : vector<8x128xf32>
    %377 = arith.negf %376 : vector<8x128xf32>
    %378 = math.exp %377 : vector<8x128xf32>
    %cst_89 = arith.constant 1.000000e+00 : f32
    %379 = vector.broadcast %cst_89 : f32 to vector<8x128xf32>
    %380 = arith.addf %379, %378 : vector<8x128xf32>
    %381 = arith.divf %379, %380 : vector<8x128xf32>
    %382 = vector.extract_strided_slice %381 {offsets = [0, 0], sizes = [8, 32], strides = [1, 1]} : vector<8x128xf32> to vector<8x32xf32>
    %383 = vector.extract_strided_slice %381 {offsets = [0, 32], sizes = [8, 32], strides = [1, 1]} : vector<8x128xf32> to vector<8x32xf32>
    %384 = vector.extract_strided_slice %381 {offsets = [0, 64], sizes = [8, 32], strides = [1, 1]} : vector<8x128xf32> to vector<8x32xf32>
    %385 = vector.extract_strided_slice %376 {offsets = [0, 96], sizes = [8, 32], strides = [1, 1]} : vector<8x128xf32> to vector<8x32xf32>
    %386 = math.tanh %385 : vector<8x32xf32>
    %387 = arith.mulf %383, %347 : vector<8x32xf32>
    %388 = arith.mulf %382, %386 : vector<8x32xf32>
    %389 = arith.addf %387, %388 : vector<8x32xf32>
    %390 = math.tanh %389 : vector<8x32xf32>
    %391 = arith.mulf %384, %390 : vector<8x32xf32>
    %c64_90 = arith.constant 64 : index
    %c0_91 = arith.constant 0 : index
    %392 = vector.load %arg7[%c64_90, %c0_91] : memref<72x32xf32, #tpu.memory_space<vmem>>, vector<8x32xf32>
    tpu.vector_store %arg7[%c64_90, %c0_91], %391 {strides = array<i32>} : memref<72x32xf32, #tpu.memory_space<vmem>>, vector<8x32xf32>,
    return
  }
}

</mosaic_0001>

<llo_original>
// kernel: tpu_custom_call.1
$region0: #{tpu_custom_call.1}
  #allocation0 [shape = 'u32[]', space=smem, size = 0x4, offset = 0x4, fixed_abs, tag = 'smem constant byte address 0x4 - core index']
  #allocation1 [shape = 'u32[144,128]{1,0:T(1,128)}', space=vmem, size = 0x12000, scoped, tag = 'internal scratch']
  #allocation2 [shape = 'f32[72,128]{1,0:T(8,128)}', space=vmem, size = 0x9000, scoped, tag = 'scratch operand']
  %s0 = inlined_call_operand.vmem [shape: bf16[72,32], index: 0, kind: input, shape index: {}]
  %s1 = inlined_call_operand.vmem [shape: bf16[32,128], index: 1, kind: input, shape index: {}]
  %s2 = inlined_call_operand.vmem [shape: bf16[32,128], index: 2, kind: input, shape index: {}]
  %s3 = inlined_call_operand.vmem [shape: f32[1,128], index: 3, kind: input, shape index: {}]
  %s4 = inlined_call_operand.vmem [shape: bf16[32,128], index: 4, kind: input, shape index: {}]
  %s5 = inlined_call_operand.vmem [shape: bf16[32,128], index: 5, kind: input, shape index: {}]
  %s6 = inlined_call_operand.vmem [shape: f32[1,128], index: 6, kind: input, shape index: {}]
  %s7 = inlined_call_operand.vmem [shape: f32[72,32], index: 7, kind: output, shape index: {}]
  %s8 = sld [smem:[#allocation0]]
  $region38: #{tpu_custom_call.1} parent=0
    _
  %s10 = ssub.s32 1, %s8
  %s11 = scalar_select 0, %s10, %s8
  // Predicated region
  $region2: #{tpu_custom_call.1} parent=0 // pred_check
    _
  $region3: #{tpu_custom_call.1} parent=0 // pred_check_branch
    %13 = sbr.rel (0) target = $region5
  $region4: #{tpu_custom_call.1} parent=0 // pred_region
    _
  $region5: #{tpu_custom_call.1} parent=0 // pred_fallthru
    _
  // Predicated region
  $region6: #{tpu_custom_call.1} parent=0 // pred_check
    _
  $region7: #{tpu_custom_call.1} parent=0 // pred_check_branch
    %15 = sbr.rel (0) target = $region9
  $region8: #{tpu_custom_call.1} parent=0 // pred_region
    _
  $region9: #{tpu_custom_call.1} parent=0 // pred_fallthru
    _
  // Predicated region
  $region10: #{tpu_custom_call.1} parent=0 // pred_check
    _
  $region11: #{tpu_custom_call.1} parent=0 // pred_check_branch
    %17 = sbr.rel (0) target = $region13
  $region12: #{tpu_custom_call.1} parent=0 // pred_region
    _
  $region13: #{tpu_custom_call.1} parent=0 // pred_fallthru
    _
  // Predicated region
  $region14: #{tpu_custom_call.1} parent=0 // pred_check
    _
  $region15: #{tpu_custom_call.1} parent=0 // pred_check_branch
    %19 = sbr.rel (0) target = $region17
  $region16: #{tpu_custom_call.1} parent=0 // pred_region
    _
  $region17: #{tpu_custom_call.1} parent=0 // pred_fallthru
    _
  // Predicated region
  $region18: #{tpu_custom_call.1} parent=0 // pred_check
    _
  $region19: #{tpu_custom_call.1} parent=0 // pred_check_branch
    %21 = sbr.rel (0) target = $region21
  $region20: #{tpu_custom_call.1} parent=0 // pred_region
    _
  $region21: #{tpu_custom_call.1} parent=0 // pred_fallthru
    _
  // Predicated region
  $region22: #{tpu_custom_call.1} parent=0 // pred_check
    _
  $region23: #{tpu_custom_call.1} parent=0 // pred_check_branch
    %23 = sbr.rel (0) target = $region25
  $region24: #{tpu_custom_call.1} parent=0 // pred_region
    _
  $region25: #{tpu_custom_call.1} parent=0 // pred_fallthru
    _
  // Predicated region
  $region26: #{tpu_custom_call.1} parent=0 // pred_check
    _
  $region27: #{tpu_custom_call.1} parent=0 // pred_check_branch
    %25 = sbr.rel (0) target = $region29
  $region28: #{tpu_custom_call.1} parent=0 // pred_region
    _
  $region29: #{tpu_custom_call.1} parent=0 // pred_fallthru
    _
  %v27 = vld [vmem:[%s1] sm:$0xf]
  %v28 = vld [vmem:[%s1 + $0x4] sm:$0xf]
  %v29 = vld [vmem:[%s1 + $0x8] sm:$0xf]
  %v30 = vld [vmem:[%s1 + $0xc] sm:$0xf]
  %v31 = vld [vmem:[%s4] sm:$0xf]
  %v32 = vld [vmem:[%s4 + $0x4] sm:$0xf]
  %v33 = vld [vmem:[%s4 + $0x8] sm:$0xf]
  %v34 = vld [vmem:[%s4 + $0xc] sm:$0xf]
  %v35 = vld [vmem:[%s2] sm:$0xf]
  %v36 = vld [vmem:[%s2 + $0x4] sm:$0xf]
  %v37 = vld [vmem:[%s2 + $0x8] sm:$0xf]
  %v38 = vld [vmem:[%s2 + $0xc] sm:$0xf]
  %v39 = vld [vmem:[%s5] sm:$0xf]
  %v40 = vld [vmem:[%s5 + $0x4] sm:$0xf]
  %v41 = vld [vmem:[%s5 + $0x8] sm:$0xf]
  %v42 = vld [vmem:[%s5 + $0xc] sm:$0xf]
  %v43 = vld [vmem:[%s3] sm:$0x1]
  %v44 = vld [vmem:[%s6] sm:$0x1]
  %v45 = vld [vmem:[%s0] sm:$0xf]
  %v46 = vld [vmem:[%s0 + $0x4] sm:$0xf]
  %v47 = vld [vmem:[%s0 + $0x8] sm:$0xf]
  %v48 = vld [vmem:[%s0 + $0xc] sm:$0xf]
  %v49 = vld [vmem:[%s0 + $0x10] sm:$0xf]
  %v50 = vld [vmem:[%s0 + $0x14] sm:$0xf]
  %v51 = vld [vmem:[%s0 + $0x18] sm:$0xf]
  %v52 = vld [vmem:[%s0 + $0x1c] sm:$0xf]
  %v53 = vld [vmem:[%s0 + $0x20] sm:$0xf]
  %v55 = vlaneseq
  %v56 = vshrl.u32 %v55, 7
  %v57 = vsub.s32 0, %v56
  %v58 = vrot.slane %v43, %v57
  %v69 = vunpack.c.l.b16 %v45
  %v70 = vunpack.c.l.b16 %v46
  %v71 = vunpack.c.l.b16 %v47
  %v72 = vunpack.c.l.b16 %v48
  %v73 = vunpack.c.l.b16 %v49
  %v74 = vunpack.c.l.b16 %v50
  %v75 = vunpack.c.l.b16 %v51
  %v76 = vunpack.c.l.b16 %v52
  %v77 = vunpack.c.l.b16 %v53
  %v78 = vpack.c.b16 %v70, %v69
  %v79 = vpack.c.b16 %v72, %v71
  %v80 = vpack.c.b16 %v74, %v73
  %v81 = vpack.c.b16 %v76, %v75
  %v82 = vpack.c.b16 %v77, %v77
  %v87 = vunpack.c.l.b16 %v27
  %v88 = vunpack.c.l.b16 %v28
  %v89 = vunpack.c.l.b16 %v29
  %v90 = vunpack.c.l.b16 %v30
  %v91 = vpack.c.b16 %v88, %v87
  %v92 = vpack.c.b16 %v90, %v89
  %vm95 = vcmask 261120
  %v97 = vsel %vm95, %v78, 0
  %v100 = vsel %vm95, %v79, 0
  %v103 = vsel %vm95, %v80, 0
  %v106 = vsel %vm95, %v81, 0
  %v109 = vsel %vm95, %v82, 0
  %111 = vmatprep.subr.bf16.mxu0 0
  %112 = vmatpush1.bf16.msra.mxu0 %v91
  %113 = vmatprep.subr.bf16.mxu0 0
  %114 = vmatpush1.bf16.msra.mxu0 %v92
  %115 = vmatprep.subr.bf16.mxu0 0
  %116 = vmatpush1.bf16.msra.mxu0 0
  %117 = vmatprep.subr.bf16.mxu0 0
  %118 = vmatpush1.bf16.msra.mxu0 0
  %119 = vmatprep.subr.bf16.mxu0 0
  %120 = vmatpush1.bf16.msra.mxu0 0
  %121 = vmatprep.subr.bf16.mxu0 0
  %122 = vmatpush1.bf16.msra.mxu0 0
  %123 = vmatprep.subr.bf16.mxu0 0
  %124 = vmatpush1.bf16.msra.mxu0 0
  %125 = vmatprep.subr.bf16.mxu0 0
  %126 = vmatpush1.bf16.msra.mxu0 0
  %127 = vmatprep.subr.bf16.mxu0 0
  %128 = vmatpush1.bf16.msra.mxu0 0
  %129 = vmatprep.subr.bf16.mxu0 0
  %130 = vmatpush1.bf16.msra.mxu0 0
  %131 = vmatprep.subr.bf16.mxu0 0
  %132 = vmatpush1.bf16.msra.mxu0 0
  %133 = vmatprep.subr.bf16.mxu0 0
  %134 = vmatpush1.bf16.msra.mxu0 0
  %135 = vmatprep.subr.bf16.mxu0 0
  %136 = vmatpush1.bf16.msra.mxu0 0
  %137 = vmatprep.subr.bf16.mxu0 0
  %138 = vmatpush1.bf16.msra.mxu0 0
  %139 = vmatprep.subr.bf16.mxu0 0
  %140 = vmatpush1.bf16.msra.mxu0 0
  %141 = vmatprep.subr.bf16.mxu0 0
  %142 = vmatpush1.bf16.msra.mxu0 0
  %143 = vmatprep.mubr.bf16.mxu0 0
  %144 = vmatmul.mubr.bf16.gmra.mrb[0].mxu0 %v97
  %v145 = vpop.f32.mrb[0].mxu0
  %v146 = vadd.f32 %v58, %v145
  %v147 = vpop.f32.mrb[0].mxu0
  %v148 = vpop.f32.mrb[0].mxu0
  %v149 = vadd.f32 %v58, %v148
  %v150 = vpop.f32.mrb[0].mxu0
  %151 = vmatprep.mubr.bf16.mxu0 0
  %152 = vmatmul.mubr.bf16.gmra.mrb[0].mxu0 %v100
  %v153 = vpop.f32.mrb[0].mxu0
  %v154 = vadd.f32 %v58, %v153
  %v155 = vpop.f32.mrb[0].mxu0
  %v156 = vpop.f32.mrb[0].mxu0
  %v157 = vadd.f32 %v58, %v156
  %v158 = vpop.f32.mrb[0].mxu0
  %159 = vmatprep.mubr.bf16.mxu0 0
  %160 = vmatmul.mubr.bf16.gmra.mrb[0].mxu0 %v103
  %v161 = vpop.f32.mrb[0].mxu0
  %v162 = vadd.f32 %v58, %v161
  %v163 = vpop.f32.mrb[0].mxu0
  %v164 = vpop.f32.mrb[0].mxu0
  %v165 = vadd.f32 %v58, %v164
  %v166 = vpop.f32.mrb[0].mxu0
  %167 = vmatprep.mubr.bf16.mxu0 0
  %168 = vmatmul.mubr.bf16.gmra.mrb[0].mxu0 %v106
  %v169 = vpop.f32.mrb[0].mxu0
  %v170 = vadd.f32 %v58, %v169
  %v171 = vpop.f32.mrb[0].mxu0
  %v172 = vpop.f32.mrb[0].mxu0
  %v173 = vadd.f32 %v58, %v172
  %v174 = vpop.f32.mrb[0].mxu0
  %175 = vmatprep.mubr.bf16.mxu0 0
  %176 = vmatmul.mubr.bf16.gmra.mrb[0].mxu0 %v109
  %v177 = vpop.f32.mrb[0].mxu0
  %v178 = vadd.f32 %v58, %v177
  %v179 = vpop.f32.mrb[0].mxu0
  %v180 = vpop.f32.mrb[0].mxu0
  %v181 = vpop.f32.mrb[0].mxu0
  %182 = vdwg.mxu0
  %183 = vst [vmem:[#allocation2] sm:$0xff] %v146
  %184 = vst [vmem:[#allocation2 + $0x8] sm:$0xff] %v149
  %185 = vst [vmem:[#allocation2 + $0x10] sm:$0xff] %v154
  %186 = vst [vmem:[#allocation2 + $0x18] sm:$0xff] %v157
  %187 = vst [vmem:[#allocation2 + $0x20] sm:$0xff] %v162
  %188 = vst [vmem:[#allocation2 + $0x28] sm:$0xff] %v165
  %189 = vst [vmem:[#allocation2 + $0x30] sm:$0xff] %v170
  %190 = vst [vmem:[#allocation2 + $0x38] sm:$0xff] %v173
  %191 = vst [vmem:[#allocation2 + $0x40] sm:$0xff] %v178
  %v192 = vld [vmem:[#allocation2] sm:$0xff]
  %v197 = vunpack.c.l.b16 %v35
  %v198 = vunpack.c.l.b16 %v36
  %v199 = vunpack.c.l.b16 %v37
  %v200 = vunpack.c.l.b16 %v38
  %v201 = vpack.c.b16 %v198, %v197
  %v202 = vpack.c.b16 %v200, %v199
  %v206 = vsel %vm95, 0, 0
  %208 = vmatprep.subr.bf16.mxu0 0
  %209 = vmatpush1.bf16.msra.mxu0 %v201
  %210 = vmatprep.subr.bf16.mxu0 0
  %211 = vmatpush1.bf16.msra.mxu0 %v202
  %212 = vmatprep.subr.bf16.mxu0 0
  %213 = vmatpush1.bf16.msra.mxu0 0
  %214 = vmatprep.subr.bf16.mxu0 0
  %215 = vmatpush1.bf16.msra.mxu0 0
  %216 = vmatprep.subr.bf16.mxu0 0
  %217 = vmatpush1.bf16.msra.mxu0 0
  %218 = vmatprep.subr.bf16.mxu0 0
  %219 = vmatpush1.bf16.msra.mxu0 0
  %220 = vmatprep.subr.bf16.mxu0 0
  %221 = vmatpush1.bf16.msra.mxu0 0
  %222 = vmatprep.subr.bf16.mxu0 0
  %223 = vmatpush1.bf16.msra.mxu0 0
  %224 = vmatprep.subr.bf16.mxu0 0
  %225 = vmatpush1.bf16.msra.mxu0 0
  %226 = vmatprep.subr.bf16.mxu0 0
  %227 = vmatpush1.bf16.msra.mxu0 0
  %228 = vmatprep.subr.bf16.mxu0 0
  %229 = vmatpush1.bf16.msra.mxu0 0
  %230 = vmatprep.subr.bf16.mxu0 0
  %231 = vmatpush1.bf16.msra.mxu0 0
  %232 = vmatprep.subr.bf16.mxu0 0
  %233 = vmatpush1.bf16.msra.mxu0 0
  %234 = vmatprep.subr.bf16.mxu0 0
  %235 = vmatpush1.bf16.msra.mxu0 0
  %236 = vmatprep.subr.bf16.mxu0 0
  %237 = vmatpush1.bf16.msra.mxu0 0
  %238 = vmatprep.subr.bf16.mxu0 0
  %239 = vmatpush1.bf16.msra.mxu0 0
  %240 = vmatprep.mubr.bf16.mxu0 0
  %241 = vmatmul.mubr.bf16.gmra.mrb[0].mxu0 %v206
  %v242 = vpop.f32.mrb[0].mxu0
  %v243 = vadd.f32 0.0, %v242
  %v244 = vpop.f32.mrb[0].mxu0
  %v245 = vpop.f32.mrb[0].mxu0
  %v246 = vpop.f32.mrb[0].mxu0
  %247 = vdwg.mxu0
  %v248 = vadd.f32 %v192, %v243
  %v249 = vxor.u32 %v248, 2147483648
  %v250 = vmul.f32 %v249, 1.442695
  %v251 = vpow.pop %v250
  %v252 = vadd.f32 %v251, 1.0
  %v253 = vrcp.pop %v252
  %v254 = vmul.f32 1.0, %v253
  %v255 = vtanh.pop %v248
  %v256 = vmul.f32 %v254, 0.0
  %258 = vrot.lane.b32.xlu0 %v255, 32
  %v259 = vpop.permute.xlu0 %258
  %v261 = vmul.f32 %v254, %v259
  %263 = vrot.lane.b32.xlu0 %v261, 32
  %v264 = vpop.permute.xlu0 %263
  %v266 = vadd.f32 %v256, %v264
  %v267 = vtanh.pop %v266
  %269 = vrot.lane.b32.xlu0 %v267, 32
  %v270 = vpop.permute.xlu0 %269
  %v272 = vmul.f32 %v254, %v270
  %v273 = vpack.c.bf16 %v272, %v272
  %v278 = vunpack.c.l.b16 %v39
  %v279 = vunpack.c.l.b16 %v40
  %v280 = vunpack.c.l.b16 %v41
  %v281 = vunpack.c.l.b16 %v42
  %v282 = vpack.c.b16 %v279, %v278
  %v283 = vpack.c.b16 %v281, %v280
  %286 = vmatprep.subr.bf16.mxu0 0
  %287 = vmatpush1.bf16.msra.mxu0 %v282
  %288 = vmatprep.subr.bf16.mxu0 0
  %289 = vmatpush1.bf16.msra.mxu0 %v283
  %290 = vmatprep.subr.bf16.mxu0 0
  %291 = vmatpush1.bf16.msra.mxu0 0
  %292 = vmatprep.subr.bf16.mxu0 0
  %293 = vmatpush1.bf16.msra.mxu0 0
  %294 = vmatprep.subr.bf16.mxu0 0
  %295 = vmatpush1.bf16.msra.mxu0 0
  %296 = vmatprep.subr.bf16.mxu0 0
  %297 = vmatpush1.bf16.msra.mxu0 0
  %298 = vmatprep.subr.bf16.mxu0 0
  %299 = vmatpush1.bf16.msra.mxu0 0
  %300 = vmatprep.subr.bf16.mxu0 0
  %301 = vmatpush1.bf16.msra.mxu0 0
  %302 = vmatprep.subr.bf16.mxu0 0
  %303 = vmatpush1.bf16.msra.mxu0 0
  %304 = vmatprep.subr.bf16.mxu0 0
  %305 = vmatpush1.bf16.msra.mxu0 0
  %306 = vmatprep.subr.bf16.mxu0 0
  %307 = vmatpush1.bf16.msra.mxu0 0
  %308 = vmatprep.subr.bf16.mxu0 0
  %309 = vmatpush1.bf16.msra.mxu0 0
  %310 = vmatprep.subr.bf16.mxu0 0
  %311 = vmatpush1.bf16.msra.mxu0 0
  %312 = vmatprep.subr.bf16.mxu0 0
  %313 = vmatpush1.bf16.msra.mxu0 0
  %314 = vmatprep.subr.bf16.mxu0 0
  %315 = vmatpush1.bf16.msra.mxu0 0
  %316 = vmatprep.subr.bf16.mxu0 0
  %317 = vmatpush1.bf16.msra.mxu0 0
  %318 = vmatprep.mubr.bf16.mxu0 0
  %319 = vmatmul.mubr.bf16.gmra.mrb[0].mxu0 %v206
  %v320 = vpop.f32.mrb[0].mxu0
  %v321 = vadd.f32 0.0, %v320
  %v322 = vpop.f32.mrb[0].mxu0
  %v323 = vpop.f32.mrb[0].mxu0
  %v324 = vpop.f32.mrb[0].mxu0
  %325 = vdwg.mxu0
  %327 = vrot.lane.b32.xlu0 %v273, 64
  %v328 = vpop.permute.xlu0 %327
  %v333 = vunpack.c.l.b16 %v31
  %v334 = vunpack.c.l.b16 %v32
  %v335 = vunpack.c.l.b16 %v33
  %v336 = vunpack.c.l.b16 %v34
  %v337 = vpack.c.b16 %v334, %v333
  %v338 = vpack.c.b16 %v336, %v335
  %v342 = vsel %vm95, %v328, 0
  %344 = vmatprep.subr.bf16.mxu0 0
  %345 = vmatpush1.bf16.msra.mxu0 %v337
  %346 = vmatprep.subr.bf16.mxu0 0
  %347 = vmatpush1.bf16.msra.mxu0 %v338
  %348 = vmatprep.subr.bf16.mxu0 0
  %349 = vmatpush1.bf16.msra.mxu0 0
  %350 = vmatprep.subr.bf16.mxu0 0
  %351 = vmatpush1.bf16.msra.mxu0 0
  %352 = vmatprep.subr.bf16.mxu0 0
  %353 = vmatpush1.bf16.msra.mxu0 0
  %354 = vmatprep.subr.bf16.mxu0 0
  %355 = vmatpush1.bf16.msra.mxu0 0
  %356 = vmatprep.subr.bf16.mxu0 0
  %357 = vmatpush1.bf16.msra.mxu0 0
  %358 = vmatprep.subr.bf16.mxu0 0
  %359 = vmatpush1.bf16.msra.mxu0 0
  %360 = vmatprep.subr.bf16.mxu0 0
  %361 = vmatpush1.bf16.msra.mxu0 0
  %362 = vmatprep.subr.bf16.mxu0 0
  %363 = vmatpush1.bf16.msra.mxu0 0
  %364 = vmatprep.subr.bf16.mxu0 0
  %365 = vmatpush1.bf16.msra.mxu0 0
  %366 = vmatprep.subr.bf16.mxu0 0
  %367 = vmatpush1.bf16.msra.mxu0 0
  %368 = vmatprep.subr.bf16.mxu0 0
  %369 = vmatpush1.bf16.msra.mxu0 0
  %370 = vmatprep.subr.bf16.mxu0 0
  %371 = vmatpush1.bf16.msra.mxu0 0
  %372 = vmatprep.subr.bf16.mxu0 0
  %373 = vmatpush1.bf16.msra.mxu0 0
  %374 = vmatprep.subr.bf16.mxu0 0
  %375 = vmatpush1.bf16.msra.mxu0 0
  %376 = vmatprep.mubr.bf16.mxu0 0
  %377 = vmatmul.mubr.bf16.gmra.mrb[0].mxu0 %v342
  %v378 = vpop.f32.mrb[0].mxu0
  %v379 = vadd.f32 %v321, %v378
  %v380 = vpop.f32.mrb[0].mxu0
  %v381 = vpop.f32.mrb[0].mxu0
  %v382 = vpop.f32.mrb[0].mxu0
  %383 = vdwg.mxu0
  %v385 = vlaneseq
  %v386 = vshrl.u32 %v385, 7
  %v387 = vsub.s32 0, %v386
  %v388 = vrot.slane %v44, %v387
  %v390 = vadd.f32 %v379, %v388
  %v391 = vxor.u32 %v390, 2147483648
  %v392 = vmul.f32 %v391, 1.442695
  %v393 = vpow.pop %v392
  %v394 = vadd.f32 %v393, 1.0
  %v395 = vrcp.pop %v394
  %v396 = vmul.f32 1.0, %v395
  %v397 = vtanh.pop %v390
  %v398 = vmul.f32 %v396, 0.0
  %400 = vrot.lane.b32.xlu0 %v397, 32
  %v401 = vpop.permute.xlu0 %400
  %v403 = vmul.f32 %v396, %v401
  %405 = vrot.lane.b32.xlu0 %v403, 32
  %v406 = vpop.permute.xlu0 %405
  %v408 = vadd.f32 %v398, %v406
  %v409 = vtanh.pop %v408
  %411 = vrot.lane.b32.xlu0 %v409, 32
  %v412 = vpop.permute.xlu0 %411
  %v414 = vmul.f32 %v396, %v412
  %416 = vrot.lane.b32.xlu0 %v414, 64
  %v417 = vpop.permute.xlu0 %416
  %419 = vst.msk [vmem:[%s7] sm:$0xff] %vm95, %v417
  %v420 = vld [vmem:[#allocation2 + $0x8] sm:$0xff]
  %421 = vmatprep.subr.bf16.mxu0 0
  %422 = vmatpush1.bf16.msra.mxu0 %v201
  %423 = vmatprep.subr.bf16.mxu0 0
  %424 = vmatpush1.bf16.msra.mxu0 %v202
  %425 = vmatprep.subr.bf16.mxu0 0
  %426 = vmatpush1.bf16.msra.mxu0 0
  %427 = vmatprep.subr.bf16.mxu0 0
  %428 = vmatpush1.bf16.msra.mxu0 0
  %429 = vmatprep.subr.bf16.mxu0 0
  %430 = vmatpush1.bf16.msra.mxu0 0
  %431 = vmatprep.subr.bf16.mxu0 0
  %432 = vmatpush1.bf16.msra.mxu0 0
  %433 = vmatprep.subr.bf16.mxu0 0
  %434 = vmatpush1.bf16.msra.mxu0 0
  %435 = vmatprep.subr.bf16.mxu0 0
  %436 = vmatpush1.bf16.msra.mxu0 0
  %437 = vmatprep.subr.bf16.mxu0 0
  %438 = vmatpush1.bf16.msra.mxu0 0
  %439 = vmatprep.subr.bf16.mxu0 0
  %440 = vmatpush1.bf16.msra.mxu0 0
  %441 = vmatprep.subr.bf16.mxu0 0
  %442 = vmatpush1.bf16.msra.mxu0 0
  %443 = vmatprep.subr.bf16.mxu0 0
  %444 = vmatpush1.bf16.msra.mxu0 0
  %445 = vmatprep.subr.bf16.mxu0 0
  %446 = vmatpush1.bf16.msra.mxu0 0
  %447 = vmatprep.subr.bf16.mxu0 0
  %448 = vmatpush1.bf16.msra.mxu0 0
  %449 = vmatprep.subr.bf16.mxu0 0
  %450 = vmatpush1.bf16.msra.mxu0 0
  %451 = vmatprep.subr.bf16.mxu0 0
  %452 = vmatpush1.bf16.msra.mxu0 0
  %453 = vmatprep.mubr.bf16.mxu0 0
  %454 = vmatmul.mubr.bf16.gmra.mrb[0].mxu0 %v342
  %v455 = vpop.f32.mrb[0].mxu0
  %v456 = vadd.f32 0.0, %v455
  %v457 = vpop.f32.mrb[0].mxu0
  %v458 = vpop.f32.mrb[0].mxu0
  %v459 = vpop.f32.mrb[0].mxu0
  %460 = vdwg.mxu0
  %v461 = vadd.f32 %v420, %v456
  %v462 = vxor.u32 %v461, 2147483648
  %v463 = vmul.f32 %v462, 1.442695
  %v464 = vpow.pop %v463
  %v465 = vadd.f32 %v464, 1.0
  %v466 = vrcp.pop %v465
  %v467 = vmul.f32 1.0, %v466
  %v468 = vtanh.pop %v461
  %v469 = vmul.f32 %v467, %v266
  %471 = vrot.lane.b32.xlu0 %v468, 32
  %v472 = vpop.permute.xlu0 %471
  %v474 = vmul.f32 %v467, %v472
  %476 = vrot.lane.b32.xlu0 %v474, 32
  %v477 = vpop.permute.xlu0 %476
  %v479 = vadd.f32 %v469, %v477
  %v480 = vtanh.pop %v479
  %482 = vrot.lane.b32.xlu0 %v480, 32
  %v483 = vpop.permute.xlu0 %482
  %v485 = vmul.f32 %v467, %v483
  %v486 = vpack.c.bf16 %v485, %v485
  %v487 = vpack.c.bf16 %v414, %v414
  %489 = vrot.lane.b32.xlu0 %v487, 64
  %v490 = vpop.permute.xlu0 %489
  %v492 = vsel %vm95, %v490, 0
  %494 = vmatprep.subr.bf16.mxu0 0
  %495 = vmatpush1.bf16.msra.mxu0 %v282
  %496 = vmatprep.subr.bf16.mxu0 0
  %497 = vmatpush1.bf16.msra.mxu0 %v283
  %498 = vmatprep.subr.bf16.mxu0 0
  %499 = vmatpush1.bf16.msra.mxu0 0
  %500 = vmatprep.subr.bf16.mxu0 0
  %501 = vmatpush1.bf16.msra.mxu0 0
  %502 = vmatprep.subr.bf16.mxu0 0
  %503 = vmatpush1.bf16.msra.mxu0 0
  %504 = vmatprep.subr.bf16.mxu0 0
  %505 = vmatpush1.bf16.msra.mxu0 0
  %506 = vmatprep.subr.bf16.mxu0 0
  %507 = vmatpush1.bf16.msra.mxu0 0
  %508 = vmatprep.subr.bf16.mxu0 0
  %509 = vmatpush1.bf16.msra.mxu0 0
  %510 = vmatprep.subr.bf16.mxu0 0
  %511 = vmatpush1.bf16.msra.mxu0 0
  %512 = vmatprep.subr.bf16.mxu0 0
  %513 = vmatpush1.bf16.msra.mxu0 0
  %514 = vmatprep.subr.bf16.mxu0 0
  %515 = vmatpush1.bf16.msra.mxu0 0
  %516 = vmatprep.subr.bf16.mxu0 0
  %517 = vmatpush1.bf16.msra.mxu0 0
  %518 = vmatprep.subr.bf16.mxu0 0
  %519 = vmatpush1.bf16.msra.mxu0 0
  %520 = vmatprep.subr.bf16.mxu0 0
  %521 = vmatpush1.bf16.msra.mxu0 0
  %522 = vmatprep.subr.bf16.mxu0 0
  %523 = vmatpush1.bf16.msra.mxu0 0
  %524 = vmatprep.subr.bf16.mxu0 0
  %525 = vmatpush1.bf16.msra.mxu0 0
  %526 = vmatprep.mubr.bf16.mxu0 0
  %527 = vmatmul.mubr.bf16.gmra.mrb[0].mxu0 %v492
  %v528 = vpop.f32.mrb[0].mxu0
  %v529 = vadd.f32 0.0, %v528
  %v530 = vpop.f32.mrb[0].mxu0
  %v531 = vpop.f32.mrb[0].mxu0
  %v532 = vpop.f32.mrb[0].mxu0
  %533 = vdwg.mxu0
  %535 = vrot.lane.b32.xlu0 %v486, 64
  %v536 = vpop.permute.xlu0 %535
  %v538 = vsel %vm95, %v536, 0
  %540 = vmatprep.subr.bf16.mxu0 0
  %541 = vmatpush1.bf16.msra.mxu0 %v337
  %542 = vmatprep.subr.bf16.mxu0 0
  %543 = vmatpush1.bf16.msra.mxu0 %v338
  %544 = vmatprep.subr.bf16.mxu0 0
  %545 = vmatpush1.bf16.msra.mxu0 0
  %546 = vmatprep.subr.bf16.mxu0 0
  %547 = vmatpush1.bf16.msra.mxu0 0
  %548 = vmatprep.subr.bf16.mxu0 0
  %549 = vmatpush1.bf16.msra.mxu0 0
  %550 = vmatprep.subr.bf16.mxu0 0
  %551 = vmatpush1.bf16.msra.mxu0 0
  %552 = vmatprep.subr.bf16.mxu0 0
  %553 = vmatpush1.bf16.msra.mxu0 0
  %554 = vmatprep.subr.bf16.mxu0 0
  %555 = vmatpush1.bf16.msra.mxu0 0
  %556 = vmatprep.subr.bf16.mxu0 0
  %557 = vmatpush1.bf16.msra.mxu0 0
  %558 = vmatprep.subr.bf16.mxu0 0
  %559 = vmatpush1.bf16.msra.mxu0 0
  %560 = vmatprep.subr.bf16.mxu0 0
  %561 = vmatpush1.bf16.msra.mxu0 0
  %562 = vmatprep.subr.bf16.mxu0 0
  %563 = vmatpush1.bf16.msra.mxu0 0
  %564 = vmatprep.subr.bf16.mxu0 0
  %565 = vmatpush1.bf16.msra.mxu0 0
  %566 = vmatprep.subr.bf16.mxu0 0
  %567 = vmatpush1.bf16.msra.mxu0 0
  %568 = vmatprep.subr.bf16.mxu0 0
  %569 = vmatpush1.bf16.msra.mxu0 0
  %570 = vmatprep.subr.bf16.mxu0 0
  %571 = vmatpush1.bf16.msra.mxu0 0
  %572 = vmatprep.mubr.bf16.mxu0 0
  %573 = vmatmul.mubr.bf16.gmra.mrb[0].mxu0 %v538
  %v574 = vpop.f32.mrb[0].mxu0
  %v575 = vadd.f32 %v529, %v574
  %v576 = vpop.f32.mrb[0].mxu0
  %v577 = vpop.f32.mrb[0].mxu0
  %v578 = vpop.f32.mrb[0].mxu0
  %579 = vdwg.mxu0
  %v580 = vadd.f32 %v575, %v388
  %v581 = vxor.u32 %v580, 2147483648
  %v582 = vmul.f32 %v581, 1.442695
  %v583 = vpow.pop %v582
  %v584 = vadd.f32 %v583, 1.0
  %v585 = vrcp.pop %v584
  %v586 = vmul.f32 1.0, %v585
  %v587 = vtanh.pop %v580
  %v588 = vmul.f32 %v586, %v408
  %590 = vrot.lane.b32.xlu0 %v587, 32
  %v591 = vpop.permute.xlu0 %590
  %v593 = vmul.f32 %v586, %v591
  %595 = vrot.lane.b32.xlu0 %v593, 32
  %v596 = vpop.permute.xlu0 %595
  %v598 = vadd.f32 %v588, %v596
  %v599 = vtanh.pop %v598
  %601 = vrot.lane.b32.xlu0 %v599, 32
  %v602 = vpop.permute.xlu0 %601
  %v604 = vmul.f32 %v586, %v602
  %606 = vrot.lane.b32.xlu0 %v604, 64
  %v607 = vpop.permute.xlu0 %606
  %609 = vst.msk [vmem:[%s7 + $0x8] sm:$0xff] %vm95, %v607
  %v610 = vld [vmem:[#allocation2 + $0x10] sm:$0xff]
  %611 = vmatprep.subr.bf16.mxu0 0
  %612 = vmatpush1.bf16.msra.mxu0 %v201
  %613 = vmatprep.subr.bf16.mxu0 0
  %614 = vmatpush1.bf16.msra.mxu0 %v202
  %615 = vmatprep.subr.bf16.mxu0 0
  %616 = vmatpush1.bf16.msra.mxu0 0
  %617 = vmatprep.subr.bf16.mxu0 0
  %618 = vmatpush1.bf16.msra.mxu0 0
  %619 = vmatprep.subr.bf16.mxu0 0
  %620 = vmatpush1.bf16.msra.mxu0 0
  %621 = vmatprep.subr.bf16.mxu0 0
  %622 = vmatpush1.bf16.msra.mxu0 0
  %623 = vmatprep.subr.bf16.mxu0 0
  %624 = vmatpush1.bf16.msra.mxu0 0
  %625 = vmatprep.subr.bf16.mxu0 0
  %626 = vmatpush1.bf16.msra.mxu0 0
  %627 = vmatprep.subr.bf16.mxu0 0
  %628 = vmatpush1.bf16.msra.mxu0 0
  %629 = vmatprep.subr.bf16.mxu0 0
  %630 = vmatpush1.bf16.msra.mxu0 0
  %631 = vmatprep.subr.bf16.mxu0 0
  %632 = vmatpush1.bf16.msra.mxu0 0
  %633 = vmatprep.subr.bf16.mxu0 0
  %634 = vmatpush1.bf16.msra.mxu0 0
  %635 = vmatprep.subr.bf16.mxu0 0
  %636 = vmatpush1.bf16.msra.mxu0 0
  %637 = vmatprep.subr.bf16.mxu0 0
  %638 = vmatpush1.bf16.msra.mxu0 0
  %639 = vmatprep.subr.bf16.mxu0 0
  %640 = vmatpush1.bf16.msra.mxu0 0
  %641 = vmatprep.subr.bf16.mxu0 0
  %642 = vmatpush1.bf16.msra.mxu0 0
  %643 = vmatprep.mubr.bf16.mxu0 0
  %644 = vmatmul.mubr.bf16.gmra.mrb[0].mxu0 %v538
  %v645 = vpop.f32.mrb[0].mxu0
  %v646 = vadd.f32 0.0, %v645
  %v647 = vpop.f32.mrb[0].mxu0
  %v648 = vpop.f32.mrb[0].mxu0
  %v649 = vpop.f32.mrb[0].mxu0
  %650 = vdwg.mxu0
  %v651 = vadd.f32 %v610, %v646
  %v652 = vxor.u32 %v651, 2147483648
  %v653 = vmul.f32 %v652, 1.442695
  %v654 = vpow.pop %v653
  %v655 = vadd.f32 %v654, 1.0
  %v656 = vrcp.pop %v655
  %v657 = vmul.f32 1.0, %v656
  %v658 = vtanh.pop %v651
  %v659 = vmul.f32 %v657, %v479
  %661 = vrot.lane.b32.xlu0 %v658, 32
  %v662 = vpop.permute.xlu0 %661
  %v664 = vmul.f32 %v657, %v662
  %666 = vrot.lane.b32.xlu0 %v664, 32
  %v667 = vpop.permute.xlu0 %666
  %v669 = vadd.f32 %v659, %v667
  %v670 = vtanh.pop %v669
  %672 = vrot.lane.b32.xlu0 %v670, 32
  %v673 = vpop.permute.xlu0 %672
  %v675 = vmul.f32 %v657, %v673
  %v676 = vpack.c.bf16 %v675, %v675
  %v677 = vpack.c.bf16 %v604, %v604
  %679 = vrot.lane.b32.xlu0 %v677, 64
  %v680 = vpop.permute.xlu0 %679
  %v682 = vsel %vm95, %v680, 0
  %684 = vmatprep.subr.bf16.mxu0 0
  %685 = vmatpush1.bf16.msra.mxu0 %v282
  %686 = vmatprep.subr.bf16.mxu0 0
  %687 = vmatpush1.bf16.msra.mxu0 %v283
  %688 = vmatprep.subr.bf16.mxu0 0
  %689 = vmatpush1.bf16.msra.mxu0 0
  %690 = vmatprep.subr.bf16.mxu0 0
  %691 = vmatpush1.bf16.msra.mxu0 0
  %692 = vmatprep.subr.bf16.mxu0 0
  %693 = vmatpush1.bf16.msra.mxu0 0
  %694 = vmatprep.subr.bf16.mxu0 0
  %695 = vmatpush1.bf16.msra.mxu0 0
  %696 = vmatprep.subr.bf16.mxu0 0
  %697 = vmatpush1.bf16.msra.mxu0 0
  %698 = vmatprep.subr.bf16.mxu0 0
  %699 = vmatpush1.bf16.msra.mxu0 0
  %700 = vmatprep.subr.bf16.mxu0 0
  %701 = vmatpush1.bf16.msra.mxu0 0
  %702 = vmatprep.subr.bf16.mxu0 0
  %703 = vmatpush1.bf16.msra.mxu0 0
  %704 = vmatprep.subr.bf16.mxu0 0
  %705 = vmatpush1.bf16.msra.mxu0 0
  %706 = vmatprep.subr.bf16.mxu0 0
  %707 = vmatpush1.bf16.msra.mxu0 0
  %708 = vmatprep.subr.bf16.mxu0 0
  %709 = vmatpush1.bf16.msra.mxu0 0
  %710 = vmatprep.subr.bf16.mxu0 0
  %711 = vmatpush1.bf16.msra.mxu0 0
  %712 = vmatprep.subr.bf16.mxu0 0
  %713 = vmatpush1.bf16.msra.mxu0 0
  %714 = vmatprep.subr.bf16.mxu0 0
  %715 = vmatpush1.bf16.msra.mxu0 0
  %716 = vmatprep.mubr.bf16.mxu0 0
  %717 = vmatmul.mubr.bf16.gmra.mrb[0].mxu0 %v682
  %v718 = vpop.f32.mrb[0].mxu0
  %v719 = vadd.f32 0.0, %v718
  %v720 = vpop.f32.mrb[0].mxu0
  %v721 = vpop.f32.mrb[0].mxu0
  %v722 = vpop.f32.mrb[0].mxu0
  %723 = vdwg.mxu0
  %725 = vrot.lane.b32.xlu0 %v676, 64
  %v726 = vpop.permute.xlu0 %725
  %v728 = vsel %vm95, %v726, 0
  %730 = vmatprep.subr.bf16.mxu0 0
  %731 = vmatpush1.bf16.msra.mxu0 %v337
  %732 = vmatprep.subr.bf16.mxu0 0
  %733 = vmatpush1.bf16.msra.mxu0 %v338
  %734 = vmatprep.subr.bf16.mxu0 0
  %735 = vmatpush1.bf16.msra.mxu0 0
  %736 = vmatprep.subr.bf16.mxu0 0
  %737 = vmatpush1.bf16.msra.mxu0 0
  %738 = vmatprep.subr.bf16.mxu0 0
  %739 = vmatpush1.bf16.msra.mxu0 0
  %740 = vmatprep.subr.bf16.mxu0 0
  %741 = vmatpush1.bf16.msra.mxu0 0
  %742 = vmatprep.subr.bf16.mxu0 0
  %743 = vmatpush1.bf16.msra.mxu0 0
  %744 = vmatprep.subr.bf16.mxu0 0
  %745 = vmatpush1.bf16.msra.mxu0 0
  %746 = vmatprep.subr.bf16.mxu0 0
  %747 = vmatpush1.bf16.msra.mxu0 0
  %748 = vmatprep.subr.bf16.mxu0 0
  %749 = vmatpush1.bf16.msra.mxu0 0
  %750 = vmatprep.subr.bf16.mxu0 0
  %751 = vmatpush1.bf16.msra.mxu0 0
  %752 = vmatprep.subr.bf16.mxu0 0
  %753 = vmatpush1.bf16.msra.mxu0 0
  %754 = vmatprep.subr.bf16.mxu0 0
  %755 = vmatpush1.bf16.msra.mxu0 0
  %756 = vmatprep.subr.bf16.mxu0 0
  %757 = vmatpush1.bf16.msra.mxu0 0
  %758 = vmatprep.subr.bf16.mxu0 0
  %759 = vmatpush1.bf16.msra.mxu0 0
  %760 = vmatprep.subr.bf16.mxu0 0
  %761 = vmatpush1.bf16.msra.mxu0 0
  %762 = vmatprep.mubr.bf16.mxu0 0
  %763 = vmatmul.mubr.bf16.gmra.mrb[0].mxu0 %v728
  %v764 = vpop.f32.mrb[0].mxu0
  %v765 = vadd.f32 %v719, %v764
  %v766 = vpop.f32.mrb[0].mxu0
  %v767 = vpop.f32.mrb[0].mxu0
  %v768 = vpop.f32.mrb[0].mxu0
  %769 = vdwg.mxu0
  %v770 = vadd.f32 %v765, %v388
  %v771 = vxor.u32 %v770, 2147483648
  %v772 = vmul.f32 %v771, 1.442695
  %v773 = vpow.pop %v772
  %v774 = vadd.f32 %v773, 1.0
  %v775 = vrcp.pop %v774
  %v776 = vmul.f32 1.0, %v775
  %v777 = vtanh.pop %v770
  %v778 = vmul.f32 %v776, %v598
  %780 = vrot.lane.b32.xlu0 %v777, 32
  %v781 = vpop.permute.xlu0 %780
  %v783 = vmul.f32 %v776, %v781
  %785 = vrot.lane.b32.xlu0 %v783, 32
  %v786 = vpop.permute.xlu0 %785
  %v788 = vadd.f32 %v778, %v786
  %v789 = vtanh.pop %v788
  %791 = vrot.lane.b32.xlu0 %v789, 32
  %v792 = vpop.permute.xlu0 %791
  %v794 = vmul.f32 %v776, %v792
  %796 = vrot.lane.b32.xlu0 %v794, 64
  %v797 = vpop.permute.xlu0 %796
  %799 = vst.msk [vmem:[%s7 + $0x10] sm:$0xff] %vm95, %v797
  %v800 = vld [vmem:[#allocation2 + $0x18] sm:$0xff]
  %801 = vmatprep.subr.bf16.mxu0 0
  %802 = vmatpush1.bf16.msra.mxu0 %v201
  %803 = vmatprep.subr.bf16.mxu0 0
  %804 = vmatpush1.bf16.msra.mxu0 %v202
  %805 = vmatprep.subr.bf16.mxu0 0
  %806 = vmatpush1.bf16.msra.mxu0 0
  %807 = vmatprep.subr.bf16.mxu0 0
  %808 = vmatpush1.bf16.msra.mxu0 0
  %809 = vmatprep.subr.bf16.mxu0 0
  %810 = vmatpush1.bf16.msra.mxu0 0
  %811 = vmatprep.subr.bf16.mxu0 0
  %812 = vmatpush1.bf16.msra.mxu0 0
  %813 = vmatprep.subr.bf16.mxu0 0
  %814 = vmatpush1.bf16.msra.mxu0 0
  %815 = vmatprep.subr.bf16.mxu0 0
  %816 = vmatpush1.bf16.msra.mxu0 0
  %817 = vmatprep.subr.bf16.mxu0 0
  %818 = vmatpush1.bf16.msra.mxu0 0
  %819 = vmatprep.subr.bf16.mxu0 0
  %820 = vmatpush1.bf16.msra.mxu0 0
  %821 = vmatprep.subr.bf16.mxu0 0
  %822 = vmatpush1.bf16.msra.mxu0 0
  %823 = vmatprep.subr.bf16.mxu0 0
  %824 = vmatpush1.bf16.msra.mxu0 0
  %825 = vmatprep.subr.bf16.mxu0 0
  %826 = vmatpush1.bf16.msra.mxu0 0
  %827 = vmatprep.subr.bf16.mxu0 0
  %828 = vmatpush1.bf16.msra.mxu0 0
  %829 = vmatprep.subr.bf16.mxu0 0
  %830 = vmatpush1.bf16.msra.mxu0 0
  %831 = vmatprep.subr.bf16.mxu0 0
  %832 = vmatpush1.bf16.msra.mxu0 0
  %833 = vmatprep.mubr.bf16.mxu0 0
  %834 = vmatmul.mubr.bf16.gmra.mrb[0].mxu0 %v728
  %v835 = vpop.f32.mrb[0].mxu0
  %v836 = vadd.f32 0.0, %v835
  %v837 = vpop.f32.mrb[0].mxu0
  %v838 = vpop.f32.mrb[0].mxu0
  %v839 = vpop.f32.mrb[0].mxu0
  %840 = vdwg.mxu0
  %v841 = vadd.f32 %v800, %v836
  %v842 = vxor.u32 %v841, 2147483648
  %v843 = vmul.f32 %v842, 1.442695
  %v844 = vpow.pop %v843
  %v845 = vadd.f32 %v844, 1.0
  %v846 = vrcp.pop %v845
  %v847 = vmul.f32 1.0, %v846
  %v848 = vtanh.pop %v841
  %v849 = vmul.f32 %v847, %v669
  %851 = vrot.lane.b32.xlu0 %v848, 32
  %v852 = vpop.permute.xlu0 %851
  %v854 = vmul.f32 %v847, %v852
  %856 = vrot.lane.b32.xlu0 %v854, 32
  %v857 = vpop.permute.xlu0 %856
  %v859 = vadd.f32 %v849, %v857
  %v860 = vtanh.pop %v859
  %862 = vrot.lane.b32.xlu0 %v860, 32
  %v863 = vpop.permute.xlu0 %862
  %v865 = vmul.f32 %v847, %v863
  %v866 = vpack.c.bf16 %v865, %v865
  %v867 = vpack.c.bf16 %v794, %v794
  %869 = vrot.lane.b32.xlu0 %v867, 64
  %v870 = vpop.permute.xlu0 %869
  %v872 = vsel %vm95, %v870, 0
  %874 = vmatprep.subr.bf16.mxu0 0
  %875 = vmatpush1.bf16.msra.mxu0 %v282
  %876 = vmatprep.subr.bf16.mxu0 0
  %877 = vmatpush1.bf16.msra.mxu0 %v283
  %878 = vmatprep.subr.bf16.mxu0 0
  %879 = vmatpush1.bf16.msra.mxu0 0
  %880 = vmatprep.subr.bf16.mxu0 0
  %881 = vmatpush1.bf16.msra.mxu0 0
  %882 = vmatprep.subr.bf16.mxu0 0
  %883 = vmatpush1.bf16.msra.mxu0 0
  %884 = vmatprep.subr.bf16.mxu0 0
  %885 = vmatpush1.bf16.msra.mxu0 0
  %886 = vmatprep.subr.bf16.mxu0 0
  %887 = vmatpush1.bf16.msra.mxu0 0
  %888 = vmatprep.subr.bf16.mxu0 0
  %889 = vmatpush1.bf16.msra.mxu0 0
  %890 = vmatprep.subr.bf16.mxu0 0
  %891 = vmatpush1.bf16.msra.mxu0 0
  %892 = vmatprep.subr.bf16.mxu0 0
  %893 = vmatpush1.bf16.msra.mxu0 0
  %894 = vmatprep.subr.bf16.mxu0 0
  %895 = vmatpush1.bf16.msra.mxu0 0
  %896 = vmatprep.subr.bf16.mxu0 0
  %897 = vmatpush1.bf16.msra.mxu0 0
  %898 = vmatprep.subr.bf16.mxu0 0
  %899 = vmatpush1.bf16.msra.mxu0 0
  %900 = vmatprep.subr.bf16.mxu0 0
  %901 = vmatpush1.bf16.msra.mxu0 0
  %902 = vmatprep.subr.bf16.mxu0 0
  %903 = vmatpush1.bf16.msra.mxu0 0
  %904 = vmatprep.subr.bf16.mxu0 0
  %905 = vmatpush1.bf16.msra.mxu0 0
  %906 = vmatprep.mubr.bf16.mxu0 0
  %907 = vmatmul.mubr.bf16.gmra.mrb[0].mxu0 %v872
  %v908 = vpop.f32.mrb[0].mxu0
  %v909 = vadd.f32 0.0, %v908
  %v910 = vpop.f32.mrb[0].mxu0
  %v911 = vpop.f32.mrb[0].mxu0
  %v912 = vpop.f32.mrb[0].mxu0
  %913 = vdwg.mxu0
  %915 = vrot.lane.b32.xlu0 %v866, 64
  %v916 = vpop.permute.xlu0 %915
  %v918 = vsel %vm95, %v916, 0
  %920 = vmatprep.subr.bf16.mxu0 0
  %921 = vmatpush1.bf16.msra.mxu0 %v337
  %922 = vmatprep.subr.bf16.mxu0 0
  %923 = vmatpush1.bf16.msra.mxu0 %v338
  %924 = vmatprep.subr.bf16.mxu0 0
  %925 = vmatpush1.bf16.msra.mxu0 0
  %926 = vmatprep.subr.bf16.mxu0 0
  %927 = vmatpush1.bf16.msra.mxu0 0
  %928 = vmatprep.subr.bf16.mxu0 0
  %929 = vmatpush1.bf16.msra.mxu0 0
  %930 = vmatprep.subr.bf16.mxu0 0
  %931 = vmatpush1.bf16.msra.mxu0 0
  %932 = vmatprep.subr.bf16.mxu0 0
  %933 = vmatpush1.bf16.msra.mxu0 0
  %934 = vmatprep.subr.bf16.mxu0 0
  %935 = vmatpush1.bf16.msra.mxu0 0
  %936 = vmatprep.subr.bf16.mxu0 0
  %937 = vmatpush1.bf16.msra.mxu0 0
  %938 = vmatprep.subr.bf16.mxu0 0
  %939 = vmatpush1.bf16.msra.mxu0 0
  %940 = vmatprep.subr.bf16.mxu0 0
  %941 = vmatpush1.bf16.msra.mxu0 0
  %942 = vmatprep.subr.bf16.mxu0 0
  %943 = vmatpush1.bf16.msra.mxu0 0
  %944 = vmatprep.subr.bf16.mxu0 0
  %945 = vmatpush1.bf16.msra.mxu0 0
  %946 = vmatprep.subr.bf16.mxu0 0
  %947 = vmatpush1.bf16.msra.mxu0 0
  %948 = vmatprep.subr.bf16.mxu0 0
  %949 = vmatpush1.bf16.msra.mxu0 0
  %950 = vmatprep.subr.bf16.mxu0 0
  %951 = vmatpush1.bf16.msra.mxu0 0
  %952 = vmatprep.mubr.bf16.mxu0 0
  %953 = vmatmul.mubr.bf16.gmra.mrb[0].mxu0 %v918
  %v954 = vpop.f32.mrb[0].mxu0
  %v955 = vadd.f32 %v909, %v954
  %v956 = vpop.f32.mrb[0].mxu0
  %v957 = vpop.f32.mrb[0].mxu0
  %v958 = vpop.f32.mrb[0].mxu0
  %959 = vdwg.mxu0
  %v960 = vadd.f32 %v955, %v388
  %v961 = vxor.u32 %v960, 2147483648
  %v962 = vmul.f32 %v961, 1.442695
  %v963 = vpow.pop %v962
  %v964 = vadd.f32 %v963, 1.0
  %v965 = vrcp.pop %v964
  %v966 = vmul.f32 1.0, %v965
  %v967 = vtanh.pop %v960
  %v968 = vmul.f32 %v966, %v788
  %970 = vrot.lane.b32.xlu0 %v967, 32
  %v971 = vpop.permute.xlu0 %970
  %v973 = vmul.f32 %v966, %v971
  %975 = vrot.lane.b32.xlu0 %v973, 32
  %v976 = vpop.permute.xlu0 %975
  %v978 = vadd.f32 %v968, %v976
  %v979 = vtanh.pop %v978
  %981 = vrot.lane.b32.xlu0 %v979, 32
  %v982 = vpop.permute.xlu0 %981
  %v984 = vmul.f32 %v966, %v982
  %986 = vrot.lane.b32.xlu0 %v984, 64
  %v987 = vpop.permute.xlu0 %986
  %989 = vst.msk [vmem:[%s7 + $0x18] sm:$0xff] %vm95, %v987
  %v990 = vld [vmem:[#allocation2 + $0x20] sm:$0xff]
  %991 = vmatprep.subr.bf16.mxu0 0
  %992 = vmatpush1.bf16.msra.mxu0 %v201
  %993 = vmatprep.subr.bf16.mxu0 0
  %994 = vmatpush1.bf16.msra.mxu0 %v202
  %995 = vmatprep.subr.bf16.mxu0 0
  %996 = vmatpush1.bf16.msra.mxu0 0
  %997 = vmatprep.subr.bf16.mxu0 0
  %998 = vmatpush1.bf16.msra.mxu0 0
  %999 = vmatprep.subr.bf16.mxu0 0
  %1000 = vmatpush1.bf16.msra.mxu0 0
  %1001 = vmatprep.subr.bf16.mxu0 0
  %1002 = vmatpush1.bf16.msra.mxu0 0
  %1003 = vmatprep.subr.bf16.mxu0 0
  %1004 = vmatpush1.bf16.msra.mxu0 0
  %1005 = vmatprep.subr.bf16.mxu0 0
  %1006 = vmatpush1.bf16.msra.mxu0 0
  %1007 = vmatprep.subr.bf16.mxu0 0
  %1008 = vmatpush1.bf16.msra.mxu0 0
  %1009 = vmatprep.subr.bf16.mxu0 0
  %1010 = vmatpush1.bf16.msra.mxu0 0
  %1011 = vmatprep.subr.bf16.mxu0 0
  %1012 = vmatpush1.bf16.msra.mxu0 0
  %1013 = vmatprep.subr.bf16.mxu0 0
  %1014 = vmatpush1.bf16.msra.mxu0 0
  %1015 = vmatprep.subr.bf16.mxu0 0
  %1016 = vmatpush1.bf16.msra.mxu0 0
  %1017 = vmatprep.subr.bf16.mxu0 0
  %1018 = vmatpush1.bf16.msra.mxu0 0
  %1019 = vmatprep.subr.bf16.mxu0 0
  %1020 = vmatpush1.bf16.msra.mxu0 0
  %1021 = vmatprep.subr.bf16.mxu0 0
  %1022 = vmatpush1.bf16.msra.mxu0 0
  %1023 = vmatprep.mubr.bf16.mxu0 0
  %1024 = vmatmul.mubr.bf16.gmra.mrb[0].mxu0 %v918
  %v1025 = vpop.f32.mrb[0].mxu0
  %v1026 = vadd.f32 0.0, %v1025
  %v1027 = vpop.f32.mrb[0].mxu0
  %v1028 = vpop.f32.mrb[0].mxu0
  %v1029 = vpop.f32.mrb[0].mxu0
  %1030 = vdwg.mxu0
  %v1031 = vadd.f32 %v990, %v1026
  %v1032 = vxor.u32 %v1031, 2147483648
  %v1033 = vmul.f32 %v1032, 1.442695
  %v1034 = vpow.pop %v1033
  %v1035 = vadd.f32 %v1034, 1.0
  %v1036 = vrcp.pop %v1035
  %v1037 = vmul.f32 1.0, %v1036
  %v1038 = vtanh.pop %v1031
  %v1039 = vmul.f32 %v1037, %v859
  %1041 = vrot.lane.b32.xlu0 %v1038, 32
  %v1042 = vpop.permute.xlu0 %1041
  %v1044 = vmul.f32 %v1037, %v1042
  %1046 = vrot.lane.b32.xlu0 %v1044, 32
  %v1047 = vpop.permute.xlu0 %1046
  %v1049 = vadd.f32 %v1039, %v1047
  %v1050 = vtanh.pop %v1049
  %1052 = vrot.lane.b32.xlu0 %v1050, 32
  %v1053 = vpop.permute.xlu0 %1052
  %v1055 = vmul.f32 %v1037, %v1053
  %v1056 = vpack.c.bf16 %v1055, %v1055
  %v1057 = vpack.c.bf16 %v984, %v984
  %1059 = vrot.lane.b32.xlu0 %v1057, 64
  %v1060 = vpop.permute.xlu0 %1059
  %v1062 = vsel %vm95, %v1060, 0
  %1064 = vmatprep.subr.bf16.mxu0 0
  %1065 = vmatpush1.bf16.msra.mxu0 %v282
  %1066 = vmatprep.subr.bf16.mxu0 0
  %1067 = vmatpush1.bf16.msra.mxu0 %v283
  %1068 = vmatprep.subr.bf16.mxu0 0
  %1069 = vmatpush1.bf16.msra.mxu0 0
  %1070 = vmatprep.subr.bf16.mxu0 0
  %1071 = vmatpush1.bf16.msra.mxu0 0
  %1072 = vmatprep.subr.bf16.mxu0 0
  %1073 = vmatpush1.bf16.msra.mxu0 0
  %1074 = vmatprep.subr.bf16.mxu0 0
  %1075 = vmatpush1.bf16.msra.mxu0 0
  %1076 = vmatprep.subr.bf16.mxu0 0
  %1077 = vmatpush1.bf16.msra.mxu0 0
  %1078 = vmatprep.subr.bf16.mxu0 0
  %1079 = vmatpush1.bf16.msra.mxu0 0
  %1080 = vmatprep.subr.bf16.mxu0 0
  %1081 = vmatpush1.bf16.msra.mxu0 0
  %1082 = vmatprep.subr.bf16.mxu0 0
  %1083 = vmatpush1.bf16.msra.mxu0 0
  %1084 = vmatprep.subr.bf16.mxu0 0
  %1085 = vmatpush1.bf16.msra.mxu0 0
  %1086 = vmatprep.subr.bf16.mxu0 0
  %1087 = vmatpush1.bf16.msra.mxu0 0
  %1088 = vmatprep.subr.bf16.mxu0 0
  %1089 = vmatpush1.bf16.msra.mxu0 0
  %1090 = vmatprep.subr.bf16.mxu0 0
  %1091 = vmatpush1.bf16.msra.mxu0 0
  %1092 = vmatprep.subr.bf16.mxu0 0
  %1093 = vmatpush1.bf16.msra.mxu0 0
  %1094 = vmatprep.subr.bf16.mxu0 0
  %1095 = vmatpush1.bf16.msra.mxu0 0
  %1096 = vmatprep.mubr.bf16.mxu0 0
  %1097 = vmatmul.mubr.bf16.gmra.mrb[0].mxu0 %v1062
  %v1098 = vpop.f32.mrb[0].mxu0
  %v1099 = vadd.f32 0.0, %v1098
  %v1100 = vpop.f32.mrb[0].mxu0
  %v1101 = vpop.f32.mrb[0].mxu0
  %v1102 = vpop.f32.mrb[0].mxu0
  %1103 = vdwg.mxu0
  %1105 = vrot.lane.b32.xlu0 %v1056, 64
  %v1106 = vpop.permute.xlu0 %1105
  %v1108 = vsel %vm95, %v1106, 0
  %1110 = vmatprep.subr.bf16.mxu0 0
  %1111 = vmatpush1.bf16.msra.mxu0 %v337
  %1112 = vmatprep.subr.bf16.mxu0 0
  %1113 = vmatpush1.bf16.msra.mxu0 %v338
  %1114 = vmatprep.subr.bf16.mxu0 0
  %1115 = vmatpush1.bf16.msra.mxu0 0
  %1116 = vmatprep.subr.bf16.mxu0 0
  %1117 = vmatpush1.bf16.msra.mxu0 0
  %1118 = vmatprep.subr.bf16.mxu0 0
  %1119 = vmatpush1.bf16.msra.mxu0 0
  %1120 = vmatprep.subr.bf16.mxu0 0
  %1121 = vmatpush1.bf16.msra.mxu0 0
  %1122 = vmatprep.subr.bf16.mxu0 0
  %1123 = vmatpush1.bf16.msra.mxu0 0
  %1124 = vmatprep.subr.bf16.mxu0 0
  %1125 = vmatpush1.bf16.msra.mxu0 0
  %1126 = vmatprep.subr.bf16.mxu0 0
  %1127 = vmatpush1.bf16.msra.mxu0 0
  %1128 = vmatprep.subr.bf16.mxu0 0
  %1129 = vmatpush1.bf16.msra.mxu0 0
  %1130 = vmatprep.subr.bf16.mxu0 0
  %1131 = vmatpush1.bf16.msra.mxu0 0
  %1132 = vmatprep.subr.bf16.mxu0 0
  %1133 = vmatpush1.bf16.msra.mxu0 0
  %1134 = vmatprep.subr.bf16.mxu0 0
  %1135 = vmatpush1.bf16.msra.mxu0 0
  %1136 = vmatprep.subr.bf16.mxu0 0
  %1137 = vmatpush1.bf16.msra.mxu0 0
  %1138 = vmatprep.subr.bf16.mxu0 0
  %1139 = vmatpush1.bf16.msra.mxu0 0
  %1140 = vmatprep.subr.bf16.mxu0 0
  %1141 = vmatpush1.bf16.msra.mxu0 0
  %1142 = vmatprep.mubr.bf16.mxu0 0
  %1143 = vmatmul.mubr.bf16.gmra.mrb[0].mxu0 %v1108
  %v1144 = vpop.f32.mrb[0].mxu0
  %v1145 = vadd.f32 %v1099, %v1144
  %v1146 = vpop.f32.mrb[0].mxu0
  %v1147 = vpop.f32.mrb[0].mxu0
  %v1148 = vpop.f32.mrb[0].mxu0
  %1149 = vdwg.mxu0
  %v1150 = vadd.f32 %v1145, %v388
  %v1151 = vxor.u32 %v1150, 2147483648
  %v1152 = vmul.f32 %v1151, 1.442695
  %v1153 = vpow.pop %v1152
  %v1154 = vadd.f32 %v1153, 1.0
  %v1155 = vrcp.pop %v1154
  %v1156 = vmul.f32 1.0, %v1155
  %v1157 = vtanh.pop %v1150
  %v1158 = vmul.f32 %v1156, %v978
  %1160 = vrot.lane.b32.xlu0 %v1157, 32
  %v1161 = vpop.permute.xlu0 %1160
  %v1163 = vmul.f32 %v1156, %v1161
  %1165 = vrot.lane.b32.xlu0 %v1163, 32
  %v1166 = vpop.permute.xlu0 %1165
  %v1168 = vadd.f32 %v1158, %v1166
  %v1169 = vtanh.pop %v1168
  %1171 = vrot.lane.b32.xlu0 %v1169, 32
  %v1172 = vpop.permute.xlu0 %1171
  %v1174 = vmul.f32 %v1156, %v1172
  %1176 = vrot.lane.b32.xlu0 %v1174, 64
  %v1177 = vpop.permute.xlu0 %1176
  %1179 = vst.msk [vmem:[%s7 + $0x20] sm:$0xff] %vm95, %v1177
  %v1180 = vld [vmem:[#allocation2 + $0x28] sm:$0xff]
  %1181 = vmatprep.subr.bf16.mxu0 0
  %1182 = vmatpush1.bf16.msra.mxu0 %v201
  %1183 = vmatprep.subr.bf16.mxu0 0
  %1184 = vmatpush1.bf16.msra.mxu0 %v202
  %1185 = vmatprep.subr.bf16.mxu0 0
  %1186 = vmatpush1.bf16.msra.mxu0 0
  %1187 = vmatprep.subr.bf16.mxu0 0
  %1188 = vmatpush1.bf16.msra.mxu0 0
  %1189 = vmatprep.subr.bf16.mxu0 0
  %1190 = vmatpush1.bf16.msra.mxu0 0
  %1191 = vmatprep.subr.bf16.mxu0 0
  %1192 = vmatpush1.bf16.msra.mxu0 0
  %1193 = vmatprep.subr.bf16.mxu0 0
  %1194 = vmatpush1.bf16.msra.mxu0 0
  %1195 = vmatprep.subr.bf16.mxu0 0
  %1196 = vmatpush1.bf16.msra.mxu0 0
  %1197 = vmatprep.subr.bf16.mxu0 0
  %1198 = vmatpush1.bf16.msra.mxu0 0
  %1199 = vmatprep.subr.bf16.mxu0 0
  %1200 = vmatpush1.bf16.msra.mxu0 0
  %1201 = vmatprep.subr.bf16.mxu0 0
  %1202 = vmatpush1.bf16.msra.mxu0 0
  %1203 = vmatprep.subr.bf16.mxu0 0
  %1204 = vmatpush1.bf16.msra.mxu0 0
  %1205 = vmatprep.subr.bf16.mxu0 0
  %1206 = vmatpush1.bf16.msra.mxu0 0
  %1207 = vmatprep.subr.bf16.mxu0 0
  %1208 = vmatpush1.bf16.msra.mxu0 0
  %1209 = vmatprep.subr.bf16.mxu0 0
  %1210 = vmatpush1.bf16.msra.mxu0 0
  %1211 = vmatprep.subr.bf16.mxu0 0
  %1212 = vmatpush1.bf16.msra.mxu0 0
  %1213 = vmatprep.mubr.bf16.mxu0 0
  %1214 = vmatmul.mubr.bf16.gmra.mrb[0].mxu0 %v1108
  %v1215 = vpop.f32.mrb[0].mxu0
  %v1216 = vadd.f32 0.0, %v1215
  %v1217 = vpop.f32.mrb[0].mxu0
  %v1218 = vpop.f32.mrb[0].mxu0
  %v1219 = vpop.f32.mrb[0].mxu0
  %1220 = vdwg.mxu0
  %v1221 = vadd.f32 %v1180, %v1216
  %v1222 = vxor.u32 %v1221, 2147483648
  %v1223 = vmul.f32 %v1222, 1.442695
  %v1224 = vpow.pop %v1223
  %v1225 = vadd.f32 %v1224, 1.0
  %v1226 = vrcp.pop %v1225
  %v1227 = vmul.f32 1.0, %v1226
  %v1228 = vtanh.pop %v1221
  %v1229 = vmul.f32 %v1227, %v1049
  %1231 = vrot.lane.b32.xlu0 %v1228, 32
  %v1232 = vpop.permute.xlu0 %1231
  %v1234 = vmul.f32 %v1227, %v1232
  %1236 = vrot.lane.b32.xlu0 %v1234, 32
  %v1237 = vpop.permute.xlu0 %1236
  %v1239 = vadd.f32 %v1229, %v1237
  %v1240 = vtanh.pop %v1239
  %1242 = vrot.lane.b32.xlu0 %v1240, 32
  %v1243 = vpop.permute.xlu0 %1242
  %v1245 = vmul.f32 %v1227, %v1243
  %v1246 = vpack.c.bf16 %v1245, %v1245
  %v1247 = vpack.c.bf16 %v1174, %v1174
  %1249 = vrot.lane.b32.xlu0 %v1247, 64
  %v1250 = vpop.permute.xlu0 %1249
  %v1252 = vsel %vm95, %v1250, 0
  %1254 = vmatprep.subr.bf16.mxu0 0
  %1255 = vmatpush1.bf16.msra.mxu0 %v282
  %1256 = vmatprep.subr.bf16.mxu0 0
  %1257 = vmatpush1.bf16.msra.mxu0 %v283
  %1258 = vmatprep.subr.bf16.mxu0 0
  %1259 = vmatpush1.bf16.msra.mxu0 0
  %1260 = vmatprep.subr.bf16.mxu0 0
  %1261 = vmatpush1.bf16.msra.mxu0 0
  %1262 = vmatprep.subr.bf16.mxu0 0
  %1263 = vmatpush1.bf16.msra.mxu0 0
  %1264 = vmatprep.subr.bf16.mxu0 0
  %1265 = vmatpush1.bf16.msra.mxu0 0
  %1266 = vmatprep.subr.bf16.mxu0 0
  %1267 = vmatpush1.bf16.msra.mxu0 0
  %1268 = vmatprep.subr.bf16.mxu0 0
  %1269 = vmatpush1.bf16.msra.mxu0 0
  %1270 = vmatprep.subr.bf16.mxu0 0
  %1271 = vmatpush1.bf16.msra.mxu0 0
  %1272 = vmatprep.subr.bf16.mxu0 0
  %1273 = vmatpush1.bf16.msra.mxu0 0
  %1274 = vmatprep.subr.bf16.mxu0 0
  %1275 = vmatpush1.bf16.msra.mxu0 0
  %1276 = vmatprep.subr.bf16.mxu0 0
  %1277 = vmatpush1.bf16.msra.mxu0 0
  %1278 = vmatprep.subr.bf16.mxu0 0
  %1279 = vmatpush1.bf16.msra.mxu0 0
  %1280 = vmatprep.subr.bf16.mxu0 0
  %1281 = vmatpush1.bf16.msra.mxu0 0
  %1282 = vmatprep.subr.bf16.mxu0 0
  %1283 = vmatpush1.bf16.msra.mxu0 0
  %1284 = vmatprep.subr.bf16.mxu0 0
  %1285 = vmatpush1.bf16.msra.mxu0 0
  %1286 = vmatprep.mubr.bf16.mxu0 0
  %1287 = vmatmul.mubr.bf16.gmra.mrb[0].mxu0 %v1252
  %v1288 = vpop.f32.mrb[0].mxu0
  %v1289 = vadd.f32 0.0, %v1288
  %v1290 = vpop.f32.mrb[0].mxu0
  %v1291 = vpop.f32.mrb[0].mxu0
  %v1292 = vpop.f32.mrb[0].mxu0
  %1293 = vdwg.mxu0
  %1295 = vrot.lane.b32.xlu0 %v1246, 64
  %v1296 = vpop.permute.xlu0 %1295
  %v1298 = vsel %vm95, %v1296, 0
  %1300 = vmatprep.subr.bf16.mxu0 0
  %1301 = vmatpush1.bf16.msra.mxu0 %v337
  %1302 = vmatprep.subr.bf16.mxu0 0
  %1303 = vmatpush1.bf16.msra.mxu0 %v338
  %1304 = vmatprep.subr.bf16.mxu0 0
  %1305 = vmatpush1.bf16.msra.mxu0 0
  %1306 = vmatprep.subr.bf16.mxu0 0
  %1307 = vmatpush1.bf16.msra.mxu0 0
  %1308 = vmatprep.subr.bf16.mxu0 0
  %1309 = vmatpush1.bf16.msra.mxu0 0
  %1310 = vmatprep.subr.bf16.mxu0 0
  %1311 = vmatpush1.bf16.msra.mxu0 0
  %1312 = vmatprep.subr.bf16.mxu0 0
  %1313 = vmatpush1.bf16.msra.mxu0 0
  %1314 = vmatprep.subr.bf16.mxu0 0
  %1315 = vmatpush1.bf16.msra.mxu0 0
  %1316 = vmatprep.subr.bf16.mxu0 0
  %1317 = vmatpush1.bf16.msra.mxu0 0
  %1318 = vmatprep.subr.bf16.mxu0 0
  %1319 = vmatpush1.bf16.msra.mxu0 0
  %1320 = vmatprep.subr.bf16.mxu0 0
  %1321 = vmatpush1.bf16.msra.mxu0 0
  %1322 = vmatprep.subr.bf16.mxu0 0
  %1323 = vmatpush1.bf16.msra.mxu0 0
  %1324 = vmatprep.subr.bf16.mxu0 0
  %1325 = vmatpush1.bf16.msra.mxu0 0
  %1326 = vmatprep.subr.bf16.mxu0 0
  %1327 = vmatpush1.bf16.msra.mxu0 0
  %1328 = vmatprep.subr.bf16.mxu0 0
  %1329 = vmatpush1.bf16.msra.mxu0 0
  %1330 = vmatprep.subr.bf16.mxu0 0
  %1331 = vmatpush1.bf16.msra.mxu0 0
  %1332 = vmatprep.mubr.bf16.mxu0 0
  %1333 = vmatmul.mubr.bf16.gmra.mrb[0].mxu0 %v1298
  %v1334 = vpop.f32.mrb[0].mxu0
  %v1335 = vadd.f32 %v1289, %v1334
  %v1336 = vpop.f32.mrb[0].mxu0
  %v1337 = vpop.f32.mrb[0].mxu0
  %v1338 = vpop.f32.mrb[0].mxu0
  %1339 = vdwg.mxu0
  %v1340 = vadd.f32 %v1335, %v388
  %v1341 = vxor.u32 %v1340, 2147483648
  %v1342 = vmul.f32 %v1341, 1.442695
  %v1343 = vpow.pop %v1342
  %v1344 = vadd.f32 %v1343, 1.0
  %v1345 = vrcp.pop %v1344
  %v1346 = vmul.f32 1.0, %v1345
  %v1347 = vtanh.pop %v1340
  %v1348 = vmul.f32 %v1346, %v1168
  %1350 = vrot.lane.b32.xlu0 %v1347, 32
  %v1351 = vpop.permute.xlu0 %1350
  %v1353 = vmul.f32 %v1346, %v1351
  %1355 = vrot.lane.b32.xlu0 %v1353, 32
  %v1356 = vpop.permute.xlu0 %1355
  %v1358 = vadd.f32 %v1348, %v1356
  %v1359 = vtanh.pop %v1358
  %1361 = vrot.lane.b32.xlu0 %v1359, 32
  %v1362 = vpop.permute.xlu0 %1361
  %v1364 = vmul.f32 %v1346, %v1362
  %1366 = vrot.lane.b32.xlu0 %v1364, 64
  %v1367 = vpop.permute.xlu0 %1366
  %1369 = vst.msk [vmem:[%s7 + $0x28] sm:$0xff] %vm95, %v1367
  %v1370 = vld [vmem:[#allocation2 + $0x30] sm:$0xff]
  %1371 = vmatprep.subr.bf16.mxu0 0
  %1372 = vmatpush1.bf16.msra.mxu0 %v201
  %1373 = vmatprep.subr.bf16.mxu0 0
  %1374 = vmatpush1.bf16.msra.mxu0 %v202
  %1375 = vmatprep.subr.bf16.mxu0 0
  %1376 = vmatpush1.bf16.msra.mxu0 0
  %1377 = vmatprep.subr.bf16.mxu0 0
  %1378 = vmatpush1.bf16.msra.mxu0 0
  %1379 = vmatprep.subr.bf16.mxu0 0
  %1380 = vmatpush1.bf16.msra.mxu0 0
  %1381 = vmatprep.subr.bf16.mxu0 0
  %1382 = vmatpush1.bf16.msra.mxu0 0
  %1383 = vmatprep.subr.bf16.mxu0 0
  %1384 = vmatpush1.bf16.msra.mxu0 0
  %1385 = vmatprep.subr.bf16.mxu0 0
  %1386 = vmatpush1.bf16.msra.mxu0 0
  %1387 = vmatprep.subr.bf16.mxu0 0
  %1388 = vmatpush1.bf16.msra.mxu0 0
  %1389 = vmatprep.subr.bf16.mxu0 0
  %1390 = vmatpush1.bf16.msra.mxu0 0
  %1391 = vmatprep.subr.bf16.mxu0 0
  %1392 = vmatpush1.bf16.msra.mxu0 0
  %1393 = vmatprep.subr.bf16.mxu0 0
  %1394 = vmatpush1.bf16.msra.mxu0 0
  %1395 = vmatprep.subr.bf16.mxu0 0
  %1396 = vmatpush1.bf16.msra.mxu0 0
  %1397 = vmatprep.subr.bf16.mxu0 0
  %1398 = vmatpush1.bf16.msra.mxu0 0
  %1399 = vmatprep.subr.bf16.mxu0 0
  %1400 = vmatpush1.bf16.msra.mxu0 0
  %1401 = vmatprep.subr.bf16.mxu0 0
  %1402 = vmatpush1.bf16.msra.mxu0 0
  %1403 = vmatprep.mubr.bf16.mxu0 0
  %1404 = vmatmul.mubr.bf16.gmra.mrb[0].mxu0 %v1298
  %v1405 = vpop.f32.mrb[0].mxu0
  %v1406 = vadd.f32 0.0, %v1405
  %v1407 = vpop.f32.mrb[0].mxu0
  %v1408 = vpop.f32.mrb[0].mxu0
  %v1409 = vpop.f32.mrb[0].mxu0
  %1410 = vdwg.mxu0
  %v1411 = vadd.f32 %v1370, %v1406
  %v1412 = vxor.u32 %v1411, 2147483648
  %v1413 = vmul.f32 %v1412, 1.442695
  %v1414 = vpow.pop %v1413
  %v1415 = vadd.f32 %v1414, 1.0
  %v1416 = vrcp.pop %v1415
  %v1417 = vmul.f32 1.0, %v1416
  %v1418 = vtanh.pop %v1411
  %v1419 = vmul.f32 %v1417, %v1239
  %1421 = vrot.lane.b32.xlu0 %v1418, 32
  %v1422 = vpop.permute.xlu0 %1421
  %v1424 = vmul.f32 %v1417, %v1422
  %1426 = vrot.lane.b32.xlu0 %v1424, 32
  %v1427 = vpop.permute.xlu0 %1426
  %v1429 = vadd.f32 %v1419, %v1427
  %v1430 = vtanh.pop %v1429
  %1432 = vrot.lane.b32.xlu0 %v1430, 32
  %v1433 = vpop.permute.xlu0 %1432
  %v1435 = vmul.f32 %v1417, %v1433
  %v1436 = vpack.c.bf16 %v1435, %v1435
  %v1437 = vpack.c.bf16 %v1364, %v1364
  %1439 = vrot.lane.b32.xlu0 %v1437, 64
  %v1440 = vpop.permute.xlu0 %1439
  %v1442 = vsel %vm95, %v1440, 0
  %1444 = vmatprep.subr.bf16.mxu0 0
  %1445 = vmatpush1.bf16.msra.mxu0 %v282
  %1446 = vmatprep.subr.bf16.mxu0 0
  %1447 = vmatpush1.bf16.msra.mxu0 %v283
  %1448 = vmatprep.subr.bf16.mxu0 0
  %1449 = vmatpush1.bf16.msra.mxu0 0
  %1450 = vmatprep.subr.bf16.mxu0 0
  %1451 = vmatpush1.bf16.msra.mxu0 0
  %1452 = vmatprep.subr.bf16.mxu0 0
  %1453 = vmatpush1.bf16.msra.mxu0 0
  %1454 = vmatprep.subr.bf16.mxu0 0
  %1455 = vmatpush1.bf16.msra.mxu0 0
  %1456 = vmatprep.subr.bf16.mxu0 0
  %1457 = vmatpush1.bf16.msra.mxu0 0
  %1458 = vmatprep.subr.bf16.mxu0 0
  %1459 = vmatpush1.bf16.msra.mxu0 0
  %1460 = vmatprep.subr.bf16.mxu0 0
  %1461 = vmatpush1.bf16.msra.mxu0 0
  %1462 = vmatprep.subr.bf16.mxu0 0
  %1463 = vmatpush1.bf16.msra.mxu0 0
  %1464 = vmatprep.subr.bf16.mxu0 0
  %1465 = vmatpush1.bf16.msra.mxu0 0
  %1466 = vmatprep.subr.bf16.mxu0 0
  %1467 = vmatpush1.bf16.msra.mxu0 0
  %1468 = vmatprep.subr.bf16.mxu0 0
  %1469 = vmatpush1.bf16.msra.mxu0 0
  %1470 = vmatprep.subr.bf16.mxu0 0
  %1471 = vmatpush1.bf16.msra.mxu0 0
  %1472 = vmatprep.subr.bf16.mxu0 0
  %1473 = vmatpush1.bf16.msra.mxu0 0
  %1474 = vmatprep.subr.bf16.mxu0 0
  %1475 = vmatpush1.bf16.msra.mxu0 0
  %1476 = vmatprep.mubr.bf16.mxu0 0
  %1477 = vmatmul.mubr.bf16.gmra.mrb[0].mxu0 %v1442
  %v1478 = vpop.f32.mrb[0].mxu0
  %v1479 = vadd.f32 0.0, %v1478
  %v1480 = vpop.f32.mrb[0].mxu0
  %v1481 = vpop.f32.mrb[0].mxu0
  %v1482 = vpop.f32.mrb[0].mxu0
  %1483 = vdwg.mxu0
  %1485 = vrot.lane.b32.xlu0 %v1436, 64
  %v1486 = vpop.permute.xlu0 %1485
  %v1488 = vsel %vm95, %v1486, 0
  %1490 = vmatprep.subr.bf16.mxu0 0
  %1491 = vmatpush1.bf16.msra.mxu0 %v337
  %1492 = vmatprep.subr.bf16.mxu0 0
  %1493 = vmatpush1.bf16.msra.mxu0 %v338
  %1494 = vmatprep.subr.bf16.mxu0 0
  %1495 = vmatpush1.bf16.msra.mxu0 0
  %1496 = vmatprep.subr.bf16.mxu0 0
  %1497 = vmatpush1.bf16.msra.mxu0 0
  %1498 = vmatprep.subr.bf16.mxu0 0
  %1499 = vmatpush1.bf16.msra.mxu0 0
  %1500 = vmatprep.subr.bf16.mxu0 0
  %1501 = vmatpush1.bf16.msra.mxu0 0
  %1502 = vmatprep.subr.bf16.mxu0 0
  %1503 = vmatpush1.bf16.msra.mxu0 0
  %1504 = vmatprep.subr.bf16.mxu0 0
  %1505 = vmatpush1.bf16.msra.mxu0 0
  %1506 = vmatprep.subr.bf16.mxu0 0
  %1507 = vmatpush1.bf16.msra.mxu0 0
  %1508 = vmatprep.subr.bf16.mxu0 0
  %1509 = vmatpush1.bf16.msra.mxu0 0
  %1510 = vmatprep.subr.bf16.mxu0 0
  %1511 = vmatpush1.bf16.msra.mxu0 0
  %1512 = vmatprep.subr.bf16.mxu0 0
  %1513 = vmatpush1.bf16.msra.mxu0 0
  %1514 = vmatprep.subr.bf16.mxu0 0
  %1515 = vmatpush1.bf16.msra.mxu0 0
  %1516 = vmatprep.subr.bf16.mxu0 0
  %1517 = vmatpush1.bf16.msra.mxu0 0
  %1518 = vmatprep.subr.bf16.mxu0 0
  %1519 = vmatpush1.bf16.msra.mxu0 0
  %1520 = vmatprep.subr.bf16.mxu0 0
  %1521 = vmatpush1.bf16.msra.mxu0 0
  %1522 = vmatprep.mubr.bf16.mxu0 0
  %1523 = vmatmul.mubr.bf16.gmra.mrb[0].mxu0 %v1488
  %v1524 = vpop.f32.mrb[0].mxu0
  %v1525 = vadd.f32 %v1479, %v1524
  %v1526 = vpop.f32.mrb[0].mxu0
  %v1527 = vpop.f32.mrb[0].mxu0
  %v1528 = vpop.f32.mrb[0].mxu0
  %1529 = vdwg.mxu0
  %v1530 = vadd.f32 %v1525, %v388
  %v1531 = vxor.u32 %v1530, 2147483648
  %v1532 = vmul.f32 %v1531, 1.442695
  %v1533 = vpow.pop %v1532
  %v1534 = vadd.f32 %v1533, 1.0
  %v1535 = vrcp.pop %v1534
  %v1536 = vmul.f32 1.0, %v1535
  %v1537 = vtanh.pop %v1530
  %v1538 = vmul.f32 %v1536, %v1358
  %1540 = vrot.lane.b32.xlu0 %v1537, 32
  %v1541 = vpop.permute.xlu0 %1540
  %v1543 = vmul.f32 %v1536, %v1541
  %1545 = vrot.lane.b32.xlu0 %v1543, 32
  %v1546 = vpop.permute.xlu0 %1545
  %v1548 = vadd.f32 %v1538, %v1546
  %v1549 = vtanh.pop %v1548
  %1551 = vrot.lane.b32.xlu0 %v1549, 32
  %v1552 = vpop.permute.xlu0 %1551
  %v1554 = vmul.f32 %v1536, %v1552
  %1556 = vrot.lane.b32.xlu0 %v1554, 64
  %v1557 = vpop.permute.xlu0 %1556
  %1559 = vst.msk [vmem:[%s7 + $0x30] sm:$0xff] %vm95, %v1557
  %v1560 = vld [vmem:[#allocation2 + $0x38] sm:$0xff]
  %1561 = vmatprep.subr.bf16.mxu0 0
  %1562 = vmatpush1.bf16.msra.mxu0 %v201
  %1563 = vmatprep.subr.bf16.mxu0 0
  %1564 = vmatpush1.bf16.msra.mxu0 %v202
  %1565 = vmatprep.subr.bf16.mxu0 0
  %1566 = vmatpush1.bf16.msra.mxu0 0
  %1567 = vmatprep.subr.bf16.mxu0 0
  %1568 = vmatpush1.bf16.msra.mxu0 0
  %1569 = vmatprep.subr.bf16.mxu0 0
  %1570 = vmatpush1.bf16.msra.mxu0 0
  %1571 = vmatprep.subr.bf16.mxu0 0
  %1572 = vmatpush1.bf16.msra.mxu0 0
  %1573 = vmatprep.subr.bf16.mxu0 0
  %1574 = vmatpush1.bf16.msra.mxu0 0
  %1575 = vmatprep.subr.bf16.mxu0 0
  %1576 = vmatpush1.bf16.msra.mxu0 0
  %1577 = vmatprep.subr.bf16.mxu0 0
  %1578 = vmatpush1.bf16.msra.mxu0 0
  %1579 = vmatprep.subr.bf16.mxu0 0
  %1580 = vmatpush1.bf16.msra.mxu0 0
  %1581 = vmatprep.subr.bf16.mxu0 0
  %1582 = vmatpush1.bf16.msra.mxu0 0
  %1583 = vmatprep.subr.bf16.mxu0 0
  %1584 = vmatpush1.bf16.msra.mxu0 0
  %1585 = vmatprep.subr.bf16.mxu0 0
  %1586 = vmatpush1.bf16.msra.mxu0 0
  %1587 = vmatprep.subr.bf16.mxu0 0
  %1588 = vmatpush1.bf16.msra.mxu0 0
  %1589 = vmatprep.subr.bf16.mxu0 0
  %1590 = vmatpush1.bf16.msra.mxu0 0
  %1591 = vmatprep.subr.bf16.mxu0 0
  %1592 = vmatpush1.bf16.msra.mxu0 0
  %1593 = vmatprep.mubr.bf16.mxu0 0
  %1594 = vmatmul.mubr.bf16.gmra.mrb[0].mxu0 %v1488
  %v1595 = vpop.f32.mrb[0].mxu0
  %v1596 = vadd.f32 0.0, %v1595
  %v1597 = vpop.f32.mrb[0].mxu0
  %v1598 = vpop.f32.mrb[0].mxu0
  %v1599 = vpop.f32.mrb[0].mxu0
  %1600 = vdwg.mxu0
  %v1601 = vadd.f32 %v1560, %v1596
  %v1602 = vxor.u32 %v1601, 2147483648
  %v1603 = vmul.f32 %v1602, 1.442695
  %v1604 = vpow.pop %v1603
  %v1605 = vadd.f32 %v1604, 1.0
  %v1606 = vrcp.pop %v1605
  %v1607 = vmul.f32 1.0, %v1606
  %v1608 = vtanh.pop %v1601
  %v1609 = vmul.f32 %v1607, %v1429
  %1611 = vrot.lane.b32.xlu0 %v1608, 32
  %v1612 = vpop.permute.xlu0 %1611
  %v1614 = vmul.f32 %v1607, %v1612
  %1616 = vrot.lane.b32.xlu0 %v1614, 32
  %v1617 = vpop.permute.xlu0 %1616
  %v1619 = vadd.f32 %v1609, %v1617
  %v1620 = vtanh.pop %v1619
  %1622 = vrot.lane.b32.xlu0 %v1620, 32
  %v1623 = vpop.permute.xlu0 %1622
  %v1625 = vmul.f32 %v1607, %v1623
  %v1626 = vpack.c.bf16 %v1625, %v1625
  %v1627 = vpack.c.bf16 %v1554, %v1554
  %1629 = vrot.lane.b32.xlu0 %v1627, 64
  %v1630 = vpop.permute.xlu0 %1629
  %v1632 = vsel %vm95, %v1630, 0
  %1634 = vmatprep.subr.bf16.mxu0 0
  %1635 = vmatpush1.bf16.msra.mxu0 %v282
  %1636 = vmatprep.subr.bf16.mxu0 0
  %1637 = vmatpush1.bf16.msra.mxu0 %v283
  %1638 = vmatprep.subr.bf16.mxu0 0
  %1639 = vmatpush1.bf16.msra.mxu0 0
  %1640 = vmatprep.subr.bf16.mxu0 0
  %1641 = vmatpush1.bf16.msra.mxu0 0
  %1642 = vmatprep.subr.bf16.mxu0 0
  %1643 = vmatpush1.bf16.msra.mxu0 0
  %1644 = vmatprep.subr.bf16.mxu0 0
  %1645 = vmatpush1.bf16.msra.mxu0 0
  %1646 = vmatprep.subr.bf16.mxu0 0
  %1647 = vmatpush1.bf16.msra.mxu0 0
  %1648 = vmatprep.subr.bf16.mxu0 0
  %1649 = vmatpush1.bf16.msra.mxu0 0
  %1650 = vmatprep.subr.bf16.mxu0 0
  %1651 = vmatpush1.bf16.msra.mxu0 0
  %1652 = vmatprep.subr.bf16.mxu0 0
  %1653 = vmatpush1.bf16.msra.mxu0 0
  %1654 = vmatprep.subr.bf16.mxu0 0
  %1655 = vmatpush1.bf16.msra.mxu0 0
  %1656 = vmatprep.subr.bf16.mxu0 0
  %1657 = vmatpush1.bf16.msra.mxu0 0
  %1658 = vmatprep.subr.bf16.mxu0 0
  %1659 = vmatpush1.bf16.msra.mxu0 0
  %1660 = vmatprep.subr.bf16.mxu0 0
  %1661 = vmatpush1.bf16.msra.mxu0 0
  %1662 = vmatprep.subr.bf16.mxu0 0
  %1663 = vmatpush1.bf16.msra.mxu0 0
  %1664 = vmatprep.subr.bf16.mxu0 0
  %1665 = vmatpush1.bf16.msra.mxu0 0
  %1666 = vmatprep.mubr.bf16.mxu0 0
  %1667 = vmatmul.mubr.bf16.gmra.mrb[0].mxu0 %v1632
  %v1668 = vpop.f32.mrb[0].mxu0
  %v1669 = vadd.f32 0.0, %v1668
  %v1670 = vpop.f32.mrb[0].mxu0
  %v1671 = vpop.f32.mrb[0].mxu0
  %v1672 = vpop.f32.mrb[0].mxu0
  %1673 = vdwg.mxu0
  %1675 = vrot.lane.b32.xlu0 %v1626, 64
  %v1676 = vpop.permute.xlu0 %1675
  %v1678 = vsel %vm95, %v1676, 0
  %1680 = vmatprep.subr.bf16.mxu0 0
  %1681 = vmatpush1.bf16.msra.mxu0 %v337
  %1682 = vmatprep.subr.bf16.mxu0 0
  %1683 = vmatpush1.bf16.msra.mxu0 %v338
  %1684 = vmatprep.subr.bf16.mxu0 0
  %1685 = vmatpush1.bf16.msra.mxu0 0
  %1686 = vmatprep.subr.bf16.mxu0 0
  %1687 = vmatpush1.bf16.msra.mxu0 0
  %1688 = vmatprep.subr.bf16.mxu0 0
  %1689 = vmatpush1.bf16.msra.mxu0 0
  %1690 = vmatprep.subr.bf16.mxu0 0
  %1691 = vmatpush1.bf16.msra.mxu0 0
  %1692 = vmatprep.subr.bf16.mxu0 0
  %1693 = vmatpush1.bf16.msra.mxu0 0
  %1694 = vmatprep.subr.bf16.mxu0 0
  %1695 = vmatpush1.bf16.msra.mxu0 0
  %1696 = vmatprep.subr.bf16.mxu0 0
  %1697 = vmatpush1.bf16.msra.mxu0 0
  %1698 = vmatprep.subr.bf16.mxu0 0
  %1699 = vmatpush1.bf16.msra.mxu0 0
  %1700 = vmatprep.subr.bf16.mxu0 0
  %1701 = vmatpush1.bf16.msra.mxu0 0
  %1702 = vmatprep.subr.bf16.mxu0 0
  %1703 = vmatpush1.bf16.msra.mxu0 0
  %1704 = vmatprep.subr.bf16.mxu0 0
  %1705 = vmatpush1.bf16.msra.mxu0 0
  %1706 = vmatprep.subr.bf16.mxu0 0
  %1707 = vmatpush1.bf16.msra.mxu0 0
  %1708 = vmatprep.subr.bf16.mxu0 0
  %1709 = vmatpush1.bf16.msra.mxu0 0
  %1710 = vmatprep.subr.bf16.mxu0 0
  %1711 = vmatpush1.bf16.msra.mxu0 0
  %1712 = vmatprep.mubr.bf16.mxu0 0
  %1713 = vmatmul.mubr.bf16.gmra.mrb[0].mxu0 %v1678
  %v1714 = vpop.f32.mrb[0].mxu0
  %v1715 = vadd.f32 %v1669, %v1714
  %v1716 = vpop.f32.mrb[0].mxu0
  %v1717 = vpop.f32.mrb[0].mxu0
  %v1718 = vpop.f32.mrb[0].mxu0
  %1719 = vdwg.mxu0
  %v1720 = vadd.f32 %v1715, %v388
  %v1721 = vxor.u32 %v1720, 2147483648
  %v1722 = vmul.f32 %v1721, 1.442695
  %v1723 = vpow.pop %v1722
  %v1724 = vadd.f32 %v1723, 1.0
  %v1725 = vrcp.pop %v1724
  %v1726 = vmul.f32 1.0, %v1725
  %v1727 = vtanh.pop %v1720
  %v1728 = vmul.f32 %v1726, %v1548
  %1730 = vrot.lane.b32.xlu0 %v1727, 32
  %v1731 = vpop.permute.xlu0 %1730
  %v1733 = vmul.f32 %v1726, %v1731
  %1735 = vrot.lane.b32.xlu0 %v1733, 32
  %v1736 = vpop.permute.xlu0 %1735
  %v1738 = vadd.f32 %v1728, %v1736
  %v1739 = vtanh.pop %v1738
  %1741 = vrot.lane.b32.xlu0 %v1739, 32
  %v1742 = vpop.permute.xlu0 %1741
  %v1744 = vmul.f32 %v1726, %v1742
  %1746 = vrot.lane.b32.xlu0 %v1744, 64
  %v1747 = vpop.permute.xlu0 %1746
  %1749 = vst.msk [vmem:[%s7 + $0x38] sm:$0xff] %vm95, %v1747
  %v1750 = vld [vmem:[#allocation2 + $0x40] sm:$0xff]
  %1751 = vmatprep.subr.bf16.mxu0 0
  %1752 = vmatpush1.bf16.msra.mxu0 %v201
  %1753 = vmatprep.subr.bf16.mxu0 0
  %1754 = vmatpush1.bf16.msra.mxu0 %v202
  %1755 = vmatprep.subr.bf16.mxu0 0
  %1756 = vmatpush1.bf16.msra.mxu0 0
  %1757 = vmatprep.subr.bf16.mxu0 0
  %1758 = vmatpush1.bf16.msra.mxu0 0
  %1759 = vmatprep.subr.bf16.mxu0 0
  %1760 = vmatpush1.bf16.msra.mxu0 0
  %1761 = vmatprep.subr.bf16.mxu0 0
  %1762 = vmatpush1.bf16.msra.mxu0 0
  %1763 = vmatprep.subr.bf16.mxu0 0
  %1764 = vmatpush1.bf16.msra.mxu0 0
  %1765 = vmatprep.subr.bf16.mxu0 0
  %1766 = vmatpush1.bf16.msra.mxu0 0
  %1767 = vmatprep.subr.bf16.mxu0 0
  %1768 = vmatpush1.bf16.msra.mxu0 0
  %1769 = vmatprep.subr.bf16.mxu0 0
  %1770 = vmatpush1.bf16.msra.mxu0 0
  %1771 = vmatprep.subr.bf16.mxu0 0
  %1772 = vmatpush1.bf16.msra.mxu0 0
  %1773 = vmatprep.subr.bf16.mxu0 0
  %1774 = vmatpush1.bf16.msra.mxu0 0
  %1775 = vmatprep.subr.bf16.mxu0 0
  %1776 = vmatpush1.bf16.msra.mxu0 0
  %1777 = vmatprep.subr.bf16.mxu0 0
  %1778 = vmatpush1.bf16.msra.mxu0 0
  %1779 = vmatprep.subr.bf16.mxu0 0
  %1780 = vmatpush1.bf16.msra.mxu0 0
  %1781 = vmatprep.subr.bf16.mxu0 0
  %1782 = vmatpush1.bf16.msra.mxu0 0
  %1783 = vmatprep.mubr.bf16.mxu0 0
  %1784 = vmatmul.mubr.bf16.gmra.mrb[0].mxu0 %v1678
  %v1785 = vpop.f32.mrb[0].mxu0
  %v1786 = vadd.f32 0.0, %v1785
  %v1787 = vpop.f32.mrb[0].mxu0
  %v1788 = vpop.f32.mrb[0].mxu0
  %v1789 = vpop.f32.mrb[0].mxu0
  %1790 = vdwg.mxu0
  %v1791 = vadd.f32 %v1750, %v1786
  %v1792 = vxor.u32 %v1791, 2147483648
  %v1793 = vmul.f32 %v1792, 1.442695
  %v1794 = vpow.pop %v1793
  %v1795 = vadd.f32 %v1794, 1.0
  %v1796 = vrcp.pop %v1795
  %v1797 = vmul.f32 1.0, %v1796
  %v1798 = vtanh.pop %v1791
  %v1799 = vmul.f32 %v1797, %v1619
  %1801 = vrot.lane.b32.xlu0 %v1798, 32
  %v1802 = vpop.permute.xlu0 %1801
  %v1804 = vmul.f32 %v1797, %v1802
  %1806 = vrot.lane.b32.xlu0 %v1804, 32
  %v1807 = vpop.permute.xlu0 %1806
  %v1809 = vadd.f32 %v1799, %v1807
  %v1810 = vtanh.pop %v1809
  %1812 = vrot.lane.b32.xlu0 %v1810, 32
  %v1813 = vpop.permute.xlu0 %1812
  %v1815 = vmul.f32 %v1797, %v1813
  %v1816 = vpack.c.bf16 %v1815, %v1815
  %v1817 = vpack.c.bf16 %v1744, %v1744
  %1819 = vrot.lane.b32.xlu0 %v1817, 64
  %v1820 = vpop.permute.xlu0 %1819
  %v1822 = vsel %vm95, %v1820, 0
  %1824 = vmatprep.subr.bf16.mxu0 0
  %1825 = vmatpush1.bf16.msra.mxu0 %v282
  %1826 = vmatprep.subr.bf16.mxu0 0
  %1827 = vmatpush1.bf16.msra.mxu0 %v283
  %1828 = vmatprep.subr.bf16.mxu0 0
  %1829 = vmatpush1.bf16.msra.mxu0 0
  %1830 = vmatprep.subr.bf16.mxu0 0
  %1831 = vmatpush1.bf16.msra.mxu0 0
  %1832 = vmatprep.subr.bf16.mxu0 0
  %1833 = vmatpush1.bf16.msra.mxu0 0
  %1834 = vmatprep.subr.bf16.mxu0 0
  %1835 = vmatpush1.bf16.msra.mxu0 0
  %1836 = vmatprep.subr.bf16.mxu0 0
  %1837 = vmatpush1.bf16.msra.mxu0 0
  %1838 = vmatprep.subr.bf16.mxu0 0
  %1839 = vmatpush1.bf16.msra.mxu0 0
  %1840 = vmatprep.subr.bf16.mxu0 0
  %1841 = vmatpush1.bf16.msra.mxu0 0
  %1842 = vmatprep.subr.bf16.mxu0 0
  %1843 = vmatpush1.bf16.msra.mxu0 0
  %1844 = vmatprep.subr.bf16.mxu0 0
  %1845 = vmatpush1.bf16.msra.mxu0 0
  %1846 = vmatprep.subr.bf16.mxu0 0
  %1847 = vmatpush1.bf16.msra.mxu0 0
  %1848 = vmatprep.subr.bf16.mxu0 0
  %1849 = vmatpush1.bf16.msra.mxu0 0
  %1850 = vmatprep.subr.bf16.mxu0 0
  %1851 = vmatpush1.bf16.msra.mxu0 0
  %1852 = vmatprep.subr.bf16.mxu0 0
  %1853 = vmatpush1.bf16.msra.mxu0 0
  %1854 = vmatprep.subr.bf16.mxu0 0
  %1855 = vmatpush1.bf16.msra.mxu0 0
  %1856 = vmatprep.mubr.bf16.mxu0 0
  %1857 = vmatmul.mubr.bf16.gmra.mrb[0].mxu0 %v1822
  %v1858 = vpop.f32.mrb[0].mxu0
  %v1859 = vadd.f32 0.0, %v1858
  %v1860 = vpop.f32.mrb[0].mxu0
  %v1861 = vpop.f32.mrb[0].mxu0
  %v1862 = vpop.f32.mrb[0].mxu0
  %1863 = vdwg.mxu0
  %1865 = vrot.lane.b32.xlu0 %v1816, 64
  %v1866 = vpop.permute.xlu0 %1865
  %v1868 = vsel %vm95, %v1866, 0
  %1870 = vmatprep.subr.bf16.mxu0 0
  %1871 = vmatpush1.bf16.msra.mxu0 %v337
  %1872 = vmatprep.subr.bf16.mxu0 0
  %1873 = vmatpush1.bf16.msra.mxu0 %v338
  %1874 = vmatprep.subr.bf16.mxu0 0
  %1875 = vmatpush1.bf16.msra.mxu0 0
  %1876 = vmatprep.subr.bf16.mxu0 0
  %1877 = vmatpush1.bf16.msra.mxu0 0
  %1878 = vmatprep.subr.bf16.mxu0 0
  %1879 = vmatpush1.bf16.msra.mxu0 0
  %1880 = vmatprep.subr.bf16.mxu0 0
  %1881 = vmatpush1.bf16.msra.mxu0 0
  %1882 = vmatprep.subr.bf16.mxu0 0
  %1883 = vmatpush1.bf16.msra.mxu0 0
  %1884 = vmatprep.subr.bf16.mxu0 0
  %1885 = vmatpush1.bf16.msra.mxu0 0
  %1886 = vmatprep.subr.bf16.mxu0 0
  %1887 = vmatpush1.bf16.msra.mxu0 0
  %1888 = vmatprep.subr.bf16.mxu0 0
  %1889 = vmatpush1.bf16.msra.mxu0 0
  %1890 = vmatprep.subr.bf16.mxu0 0
  %1891 = vmatpush1.bf16.msra.mxu0 0
  %1892 = vmatprep.subr.bf16.mxu0 0
  %1893 = vmatpush1.bf16.msra.mxu0 0
  %1894 = vmatprep.subr.bf16.mxu0 0
  %1895 = vmatpush1.bf16.msra.mxu0 0
  %1896 = vmatprep.subr.bf16.mxu0 0
  %1897 = vmatpush1.bf16.msra.mxu0 0
  %1898 = vmatprep.subr.bf16.mxu0 0
  %1899 = vmatpush1.bf16.msra.mxu0 0
  %1900 = vmatprep.subr.bf16.mxu0 0
  %1901 = vmatpush1.bf16.msra.mxu0 0
  %1902 = vmatprep.mubr.bf16.mxu0 0
  %1903 = vmatmul.mubr.bf16.gmra.mrb[0].mxu0 %v1868
  %v1904 = vpop.f32.mrb[0].mxu0
  %v1905 = vadd.f32 %v1859, %v1904
  %v1906 = vpop.f32.mrb[0].mxu0
  %v1907 = vpop.f32.mrb[0].mxu0
  %v1908 = vpop.f32.mrb[0].mxu0
  %1909 = vdwg.mxu0
  %v1910 = vadd.f32 %v1905, %v388
  %v1911 = vxor.u32 %v1910, 2147483648
  %v1912 = vmul.f32 %v1911, 1.442695
  %v1913 = vpow.pop %v1912
  %v1914 = vadd.f32 %v1913, 1.0
  %v1915 = vrcp.pop %v1914
  %v1916 = vmul.f32 1.0, %v1915
  %v1917 = vtanh.pop %v1910
  %v1918 = vmul.f32 %v1916, %v1738
  %1920 = vrot.lane.b32.xlu0 %v1917, 32
  %v1921 = vpop.permute.xlu0 %1920
  %v1923 = vmul.f32 %v1916, %v1921
  %1925 = vrot.lane.b32.xlu0 %v1923, 32
  %v1926 = vpop.permute.xlu0 %1925
  %v1928 = vadd.f32 %v1918, %v1926
  %v1929 = vtanh.pop %v1928
  %1931 = vrot.lane.b32.xlu0 %v1929, 32
  %v1932 = vpop.permute.xlu0 %1931
  %v1934 = vmul.f32 %v1916, %v1932
  %1936 = vrot.lane.b32.xlu0 %v1934, 64
  %v1937 = vpop.permute.xlu0 %1936
  %1939 = vst.msk [vmem:[%s7 + $0x40] sm:$0xff] %vm95, %v1937
  // Predicated region
  $region30: #{tpu_custom_call.1} parent=0 // pred_check
    _
  $region31: #{tpu_custom_call.1} parent=0 // pred_check_branch
    %1941 = sbr.rel (0) target = $region33
  $region32: #{tpu_custom_call.1} parent=0 // pred_region
    _
  $region33: #{tpu_custom_call.1} parent=0 // pred_fallthru
    _
  // Predicated region
  $region34: #{tpu_custom_call.1} parent=0 // pred_check
    _
  $region35: #{tpu_custom_call.1} parent=0 // pred_check_branch
    %1943 = sbr.rel (0) target = $region37
  $region36: #{tpu_custom_call.1} parent=0 // pred_region
    _
  $region37: #{tpu_custom_call.1} parent=0 // pred_fallthru
    _

</llo_original>
